<compile_context>
chip_gen: v6e
topology: v6e:2x2x1
jax: 0.10.0
libtpu: 0.0.40
codegen_flags: <defaults>
</compile_context>

<pallas_src>
import math

import jax
import jax.numpy as jnp
from jax.experimental import pallas as pl
from jax.experimental.pallas import tpu as pltpu

# ----------------------------- model hyper-params (small, synthetic) ----------
BATCH = 8          # B — multiple of 8 so vreg sublanes are full
EMB = 16           # args.embedding_size
HID = 32           # args.hidden_size
VOCAB = 64         # len(de_vocab)
AVG = 8            # args.average_size (avg_pool1d kernel)
LAYERS = 2         # args.layer_size
PAD_IDX = 0        # de_vocab.stoi['<pad>']
POOLED = VOCAB // AVG       # == the "2540" of the original config, scaled down

MAX_IN = 48                 # padded x-zone width >= max(EMB, HID, HID+POOLED)
XH = MAX_IN + HID           # 80 rows per stacked GRU weight-slab entry
NSLAB = 2 * LAYERS          # [dec_l0, dec_l1, inf_l0, inf_l1]

assert 4 * HID == 2 * VOCAB  # shared 128-lane width of the f32 bias slab

_VMEM = pl.BlockSpec(memory_space=pltpu.MemorySpace.VMEM)


# ----------------------------- fused forward kernel ---------------------------
def _fused_decoder_kernel(ids_ref, emb_pool_ref, gru_w_ref, gru_whn_ref,
                          bias_ref, vocab_w_ref, h_dec_ref, h_inf_ref,
                          logits_ref, dec_h_ref, inf_h_ref):
    f32 = jnp.float32

    # ---- slab loads (whole-array, once; bf16 weights promoted to f32) ----
    ep = emb_pool_ref[...].astype(f32)            # (V, EMB+POOLED)
    emb_tbl = ep[:, :EMB]                         # (V, EMB)
    pool_mat = ep[:, EMB:]                        # (V, POOLED)
    whn_all = gru_whn_ref[...].astype(f32)        # (H, NSLAB*H)
    b_all = bias_ref[...]                         # (NSLAB+1, 128) f32
    vocab_w = vocab_w_ref[...].astype(f32)        # (H, 2V)
    vocab_b = b_all[NSLAB:NSLAB + 1, :]           # (1, 2V)

    # ---- embedding lookup: one-hot @ table on the MXU (trivial at V=64) ----
    ids = ids_ref[...]                                                     # (B, 1)
    onehot = (jax.lax.broadcasted_iota(jnp.int32, (BATCH, VOCAB), 1)
              == ids).astype(f32)                                          # (B, V)
    x = jnp.dot(onehot, emb_tbl, preferred_element_type=f32)               # (B, E)

    def gru_layer(x, h, s):
        """PyTorch-semantics GRU cell (gate order r,z,n) from slab entry `s`.

        gru_w slab rows [0:in_dim]=W_ih^T, [MAX_IN:XH]=W_hh^T for r,z (zeros
        for the n-gate columns); one extra small (H,H) dot supplies the n
        gate's hidden term.
        """
        w_comb = gru_w_ref[s * XH:(s + 1) * XH, :].astype(f32)             # (XH, 3H)
        b_comb = b_all[s:s + 1, :3 * HID]                                  # (1, 3H)
        b_hn = b_all[s:s + 1, 3 * HID:4 * HID]                             # (1, H)
        w_hn = whn_all[:, s * HID:(s + 1) * HID]                           # (H, H)

        pad = MAX_IN - x.shape[-1]
        pieces = [x]
        if pad:
            pieces.append(jnp.zeros((BATCH, pad), f32))
        pieces.append(h)
        xh = jnp.concatenate(pieces, axis=-1)                              # (B, XH)

        g = jnp.dot(xh, w_comb, preferred_element_type=f32) + b_comb
        r = jax.nn.sigmoid(g[:, :HID])
        z = jax.nn.sigmoid(g[:, HID:2 * HID])
        h_n = jnp.dot(h, w_hn, preferred_element_type=f32) + b_hn
        n = jnp.tanh(g[:, 2 * HID:] + r * h_n)
        return (1.0 - z) * n + z * h

    # ---- decoder GRU stack (single time step) ----
    for l in range(LAYERS):
        h_new = gru_layer(x, h_dec_ref[l], l)
        dec_h_ref[l, :, :] = h_new
        x = h_new
    dec_out = x                                                            # (B, H)

    # ---- decoder vocab projection ----
    dec_logits = (jnp.dot(dec_out, vocab_w[:, :VOCAB],
                          preferred_element_type=f32) + vocab_b[:, :VOCAB])

    # ---- softmax + avg_pool1d(kernel=AVG): the 1/denom normalizer is folded
    #      through the pool matmul and applied exactly on the (B, POOLED) result
    m = jnp.max(dec_logits, axis=-1, keepdims=True)
    e = jnp.exp(dec_logits - m)
    denom = jnp.sum(e, axis=-1, keepdims=True)
    pooled = jnp.dot(e, pool_mat, preferred_element_type=f32)              # (B, POOLED)
    prob_avg = pooled / denom                                              # exact divide

    # ---- infer GRU stack (concat is pure in-kernel vreg lane work) ----
    x = jnp.concatenate([prob_avg, dec_out], axis=-1)                      # (B, POOLED+H)
    for l in range(LAYERS):
        h_new = gru_layer(x, h_inf_ref[l], LAYERS + l)
        inf_h_ref[l, :, :] = h_new
        x = h_new

    # ---- infer vocab projection ----
    inf_logits = (jnp.dot(x, vocab_w[:, VOCAB:],
                          preferred_element_type=f32) + vocab_b[:, VOCAB:])

    # Lane-dense (B, 2V) = (8, 128) combined store — one full unmasked vst.
    logits_ref[...] = jnp.concatenate([dec_logits, inf_logits], axis=-1)


# ----------------------------- pallas_call wrapper ----------------------------
@jax.jit
def decoder_forward(kparams, decoder_input_ids, h_decoder, h_infer):
    """Fused forward pass: one grid-less pallas_call for the whole Decoder step."""
    ids2d = decoder_input_ids.reshape(BATCH, 1).astype(jnp.int32)

    inputs = [ids2d, kparams["emb_pool"], kparams["gru_w"], kparams["gru_whn"],
              kparams["bias"], kparams["vocab_w"], h_decoder, h_infer]

    out_shape = (
        jax.ShapeDtypeStruct((BATCH, 2 * VOCAB), jnp.float32),     # [dec|inf] logits
        jax.ShapeDtypeStruct((LAYERS, BATCH, HID), jnp.float32),   # decoder hidden
        jax.ShapeDtypeStruct((LAYERS, BATCH, HID), jnp.float32),   # infer hidden
    )
    logits, dec_h, inf_h = pl.pallas_call(
        _fused_decoder_kernel,
        out_shape=out_shape,
        in_specs=[_VMEM] * len(inputs),
        out_specs=(_VMEM, _VMEM, _VMEM),
        # Hidden-state updates are in place: h_decoder/h_infer buffers are
        # reused for the corresponding hidden-state outputs.
        input_output_aliases={6: 1, 7: 2},
    )(*inputs)

    dec_logits = logits[:, :VOCAB][None]                           # (1, B, V)
    inf_logits = logits[:, VOCAB:][None]                           # (1, B, V)
    return dec_logits, dec_h, inf_logits, inf_h


# ----------------------------- parameter construction -------------------------
def _bf16_round(x):
    # Kernel stores weights as bf16; generating bf16-representable weights keeps
    # the f32 reference bit-identical to the kernel's promoted-to-f32 weights.
    return x.astype(jnp.bfloat16).astype(jnp.float32)


def _uniform(key, shape, scale):
    return jax.random.uniform(key, shape, jnp.float32, -scale, scale)


def init_raw_params(key):
    """PyTorch-layout parameters (used by the pure-JAX reference)."""
    keys = iter(jax.random.split(key, 32))
    p = {}

    emb = jax.random.normal(next(keys), (VOCAB, EMB), jnp.float32)
    p["embedding"] = _bf16_round(emb.at[PAD_IDX].set(0.0))

    def gru_layer(in_dim):
        s = 1.0 / math.sqrt(HID)
        return dict(
            wih_t=_bf16_round(_uniform(next(keys), (in_dim, 3 * HID), s)),  # gates [r,z,n]
            whh_t=_bf16_round(_uniform(next(keys), (HID, 3 * HID), s)),
            bih=_uniform(next(keys), (1, 3 * HID), s),
            bhh=_uniform(next(keys), (1, 3 * HID), s),
        )

    p["dec_gru"] = [gru_layer(EMB if l == 0 else HID) for l in range(LAYERS)]
    p["inf_gru"] = [gru_layer(HID + POOLED if l == 0 else HID) for l in range(LAYERS)]

    s = 1.0 / math.sqrt(HID)
    p["dec_w_t"] = _bf16_round(_uniform(next(keys), (HID, VOCAB), s))
    p["dec_b"] = _uniform(next(keys), (1, VOCAB), s)
    p["inf_w_t"] = _bf16_round(_uniform(next(keys), (HID, VOCAB), s))
    p["inf_b"] = _uniform(next(keys), (1, VOCAB), s)
    return p


def make_kernel_params(raw):
    """Pack all parameters into 5 contiguous slabs (bf16 weights, f32 biases)."""
    layers = raw["dec_gru"] + raw["inf_gru"]      # slab order: dec0, dec1, inf0, inf1

    w_rows, b_rows, whn_cols = [], [], []
    for layer in layers:
        wih_t, whh_t = layer["wih_t"], layer["whh_t"]
        in_dim = wih_t.shape[0]
        w = jnp.zeros((XH, 3 * HID), jnp.float32)
        w = w.at[:in_dim, :].set(wih_t)                          # x zone
        w = w.at[MAX_IN:, :2 * HID].set(whh_t[:, :2 * HID])      # h zone (r,z only)
        w_rows.append(w)
        b_comb = layer["bih"] + jnp.concatenate(
            [layer["bhh"][:, :2 * HID], jnp.zeros((1, HID), jnp.float32)], axis=1)
        b_rows.append(jnp.concatenate([b_comb, layer["bhh"][:, 2 * HID:]], axis=1))
        whn_cols.append(whh_t[:, 2 * HID:])

    gru_w = jnp.concatenate(w_rows, axis=0).astype(jnp.bfloat16)       # (NSLAB*XH, 3H)
    gru_whn = jnp.concatenate(whn_cols, axis=1).astype(jnp.bfloat16)   # (H, NSLAB*H)
    vocab_b = jnp.concatenate([raw["dec_b"], raw["inf_b"]], axis=1)    # (1, 2V)
    bias = jnp.concatenate(b_rows + [vocab_b], axis=0)                 # (NSLAB+1, 128) f32

    # avg_pool1d(kernel=AVG, stride=AVG) as a (V, POOLED) block matrix of 1/AVG,
    # packed next to the embedding table (same row count V).
    pool = jnp.zeros((VOCAB, POOLED), jnp.float32)
    pool = pool.at[jnp.arange(VOCAB), jnp.arange(VOCAB) // AVG].set(1.0 / AVG)
    emb_pool = jnp.concatenate([raw["embedding"], pool], axis=1).astype(jnp.bfloat16)

    vocab_w = jnp.concatenate([raw["dec_w_t"], raw["inf_w_t"]],
                              axis=1).astype(jnp.bfloat16)             # (H, 2V)

    return dict(emb_pool=emb_pool, gru_w=gru_w, gru_whn=gru_whn,
                bias=bias, vocab_w=vocab_w)


# ----------------------------- pure-JAX reference (correctness check) ---------
def _gru_cell_ref(x, h, layer):
    gi = x @ layer["wih_t"] + layer["bih"]
    gh = h @ layer["whh_t"] + layer["bhh"]
    r = jax.nn.sigmoid(gi[:, :HID] + gh[:, :HID])
    z = jax.nn.sigmoid(gi[:, HID:2 * HID] + gh[:, HID:2 * HID])
    n = jnp.tanh(gi[:, 2 * HID:] + r * gh[:, 2 * HID:])
    return (1.0 - z) * n + z * h


def decoder_forward_ref(raw, ids, h_decoder, h_infer):
    x = raw["embedding"][ids]
    hd = []
    for l in range(LAYERS):
        x = _gru_cell_ref(x, h_decoder[l], raw["dec_gru"][l])
        hd.append(x)
    dec_out = x
    dec_logits = dec_out @ raw["dec_w_t"] + raw["dec_b"]
    prob = jax.nn.softmax(dec_logits, axis=-1)
    prob_avg = prob.reshape(BATCH, POOLED, AVG).mean(-1)
    x = jnp.concatenate([prob_avg, dec_out], axis=-1)
    hi = []
    for l in range(LAYERS):
        x = _gru_cell_ref(x, h_infer[l], raw["inf_gru"][l])
        hi.append(x)
    inf_logits = x @ raw["inf_w_t"] + raw["inf_b"]
    return dec_logits[None], jnp.stack(hd), inf_logits[None], jnp.stack(hi)


# ----------------------------- main --------------------------------------------
if __name__ == "__main__":
    key = jax.random.PRNGKey(0)
    k_param, k_ids, k_hd, k_hi = jax.random.split(key, 4)

    raw_params = init_raw_params(k_param)
    kernel_params = make_kernel_params(raw_params)

    decoder_input = jax.random.randint(k_ids, (BATCH,), 0, VOCAB, dtype=jnp.int32)
    h_decoder = jax.random.normal(k_hd, (LAYERS, BATCH, HID), jnp.float32)
    h_infer = jax.random.normal(k_hi, (LAYERS, BATCH, HID), jnp.float32)

    outs = decoder_forward(kernel_params, decoder_input, h_decoder, h_infer)
    outs = jax.block_until_ready(outs)

    dec_logits, dec_h, inf_logits, inf_h = outs
    assert dec_logits.shape == (1, BATCH, VOCAB)
    assert dec_h.shape == (LAYERS, BATCH, HID)
    assert inf_logits.shape == (1, BATCH, VOCAB)
    assert inf_h.shape == (LAYERS, BATCH, HID)

    ref = decoder_forward_ref(raw_params, decoder_input, h_decoder, h_infer)
    names = ["decoder_logits", "decoder_hidden", "infer_logits", "infer_hidden"]
    for name, got, want in zip(names, outs, ref):
        assert jnp.allclose(got, want, atol=5e-4, rtol=5e-4), \
            f"mismatch vs reference: {name}"

    print("KERNEL_OK")
</pallas_src>

<mosaic_0001>
module attributes {stable_mosaic.version = 11 : i64} {
  func.func @_fused_decoder_kernel(%arg0: memref<8x1xi32, #tpu.memory_space<vmem>>, %arg1: memref<64x24xbf16, #tpu.memory_space<vmem>>, %arg2: memref<320x96xbf16, #tpu.memory_space<vmem>>, %arg3: memref<32x128xbf16, #tpu.memory_space<vmem>>, %arg4: memref<5x128xf32, #tpu.memory_space<vmem>>, %arg5: memref<32x128xbf16, #tpu.memory_space<vmem>>, %arg6: memref<2x8x32xf32, #tpu.memory_space<vmem>>, %arg7: memref<2x8x32xf32, #tpu.memory_space<vmem>>, %arg8: memref<8x128xf32, #tpu.memory_space<vmem>>, %arg9: memref<2x8x32xf32, #tpu.memory_space<vmem>>, %arg10: memref<2x8x32xf32, #tpu.memory_space<vmem>>) attributes {dimension_semantics = [], scalar_prefetch = 0 : i64, scratch_operands = 0 : i64, tpu.core_type = #tpu.core_type<tc>} {
    %c0 = arith.constant 0 : index
    %c0_0 = arith.constant 0 : index
    %0 = vector.load %arg1[%c0, %c0_0] : memref<64x24xbf16, #tpu.memory_space<vmem>>, vector<64x24xbf16>
    %1 = arith.extf %0 : vector<64x24xbf16> to vector<64x24xf32>
    %2 = vector.extract_strided_slice %1 {offsets = [0, 0], sizes = [64, 16], strides = [1, 1]} : vector<64x24xf32> to vector<64x16xf32>
    %3 = vector.extract_strided_slice %1 {offsets = [0, 16], sizes = [64, 8], strides = [1, 1]} : vector<64x24xf32> to vector<64x8xf32>
    %c0_1 = arith.constant 0 : index
    %c0_2 = arith.constant 0 : index
    %4 = vector.load %arg3[%c0_1, %c0_2] : memref<32x128xbf16, #tpu.memory_space<vmem>>, vector<32x128xbf16>
    %5 = arith.extf %4 : vector<32x128xbf16> to vector<32x128xf32>
    %c0_3 = arith.constant 0 : index
    %c0_4 = arith.constant 0 : index
    %6 = vector.load %arg4[%c0_3, %c0_4] : memref<5x128xf32, #tpu.memory_space<vmem>>, vector<5x128xf32>
    %c0_5 = arith.constant 0 : index
    %c0_6 = arith.constant 0 : index
    %7 = vector.load %arg5[%c0_5, %c0_6] : memref<32x128xbf16, #tpu.memory_space<vmem>>, vector<32x128xbf16>
    %8 = arith.extf %7 : vector<32x128xbf16> to vector<32x128xf32>
    %9 = vector.extract_strided_slice %6 {offsets = [4, 0], sizes = [1, 128], strides = [1, 1]} : vector<5x128xf32> to vector<1x128xf32>
    %c0_7 = arith.constant 0 : index
    %c0_8 = arith.constant 0 : index
    %10 = vector.load %arg0[%c0_7, %c0_8] : memref<8x1xi32, #tpu.memory_space<vmem>>, vector<8x1xi32>
    %11 = tpu.iota {dimensions = array<i32: 1>} : vector<8x64xi32>
    %12 = vector.broadcast %10 : vector<8x1xi32> to vector<8x64xi32>
    %13 = arith.cmpi eq, %11, %12 : vector<8x64xi32>
    %14 = arith.extui %13 : vector<8x64xi1> to vector<8x64xi32>
    %15 = arith.sitofp %14 : vector<8x64xi32> to vector<8x64xf32>
    %cst = arith.constant dense<0.000000e+00> : vector<8x16xf32>
    %16 = tpu.matmul %15, %2, %cst {dimension_numbers = #tpu.dot_dimension_numbers<[1], [0], [0], [1], [0, 0, 1, 1], [], []>} : vector<8x64xf32>, vector<64x16xf32>, vector<8x16xf32> -> vector<8x16xf32>
    %c0_9 = arith.constant 0 : index
    %c0_10 = arith.constant 0 : index
    %c0_11 = arith.constant 0 : index
    %17 = vector.load %arg6[%c0_9, %c0_10, %c0_11] : memref<2x8x32xf32, #tpu.memory_space<vmem>>, vector<1x8x32xf32>
    %18 = vector.shape_cast %17 : vector<1x8x32xf32> to vector<8x32xf32>
    %c0_12 = arith.constant 0 : index
    %c0_13 = arith.constant 0 : index
    %19 = vector.load %arg2[%c0_12, %c0_13] : memref<320x96xbf16, #tpu.memory_space<vmem>>, vector<80x96xbf16>
    %20 = arith.extf %19 : vector<80x96xbf16> to vector<80x96xf32>
    %21 = vector.extract_strided_slice %6 {offsets = [0, 0], sizes = [1, 96], strides = [1, 1]} : vector<5x128xf32> to vector<1x96xf32>
    %22 = vector.extract_strided_slice %6 {offsets = [0, 96], sizes = [1, 32], strides = [1, 1]} : vector<5x128xf32> to vector<1x32xf32>
    %23 = vector.extract_strided_slice %5 {offsets = [0, 0], sizes = [32, 32], strides = [1, 1]} : vector<32x128xf32> to vector<32x32xf32>
    %cst_14 = arith.constant 0.000000e+00 : f32
    %24 = vector.broadcast %cst_14 : f32 to vector<8x32xf32>
    %25 = tpu.concatenate %16, %24, %18 in 1 : vector<8x16xf32>, vector<8x32xf32>, vector<8x32xf32> -> vector<8x80xf32>
    %cst_15 = arith.constant dense<0.000000e+00> : vector<8x96xf32>
    %26 = tpu.matmul %25, %20, %cst_15 {dimension_numbers = #tpu.dot_dimension_numbers<[1], [0], [0], [1], [0, 0, 1, 1], [], []>} : vector<8x80xf32>, vector<80x96xf32>, vector<8x96xf32> -> vector<8x96xf32>
    %27 = vector.broadcast %21 : vector<1x96xf32> to vector<8x96xf32>
    %28 = arith.addf %26, %27 : vector<8x96xf32>
    %29 = vector.extract_strided_slice %28 {offsets = [0, 0], sizes = [8, 32], strides = [1, 1]} : vector<8x96xf32> to vector<8x32xf32>
    %30 = arith.negf %29 : vector<8x32xf32>
    %31 = math.exp %30 : vector<8x32xf32>
    %cst_16 = arith.constant 1.000000e+00 : f32
    %32 = vector.broadcast %cst_16 : f32 to vector<8x32xf32>
    %33 = arith.addf %32, %31 : vector<8x32xf32>
    %34 = arith.divf %32, %33 : vector<8x32xf32>
    %35 = vector.extract_strided_slice %28 {offsets = [0, 32], sizes = [8, 32], strides = [1, 1]} : vector<8x96xf32> to vector<8x32xf32>
    %36 = arith.negf %35 : vector<8x32xf32>
    %37 = math.exp %36 : vector<8x32xf32>
    %cst_17 = arith.constant 1.000000e+00 : f32
    %38 = vector.broadcast %cst_17 : f32 to vector<8x32xf32>
    %39 = arith.addf %38, %37 : vector<8x32xf32>
    %40 = arith.divf %38, %39 : vector<8x32xf32>
    %cst_18 = arith.constant dense<0.000000e+00> : vector<8x32xf32>
    %41 = tpu.matmul %18, %23, %cst_18 {dimension_numbers = #tpu.dot_dimension_numbers<[1], [0], [0], [1], [0, 0, 1, 1], [], []>} : vector<8x32xf32>, vector<32x32xf32>, vector<8x32xf32> -> vector<8x32xf32>
    %42 = vector.broadcast %22 : vector<1x32xf32> to vector<8x32xf32>
    %43 = arith.addf %41, %42 : vector<8x32xf32>
    %44 = vector.extract_strided_slice %28 {offsets = [0, 64], sizes = [8, 32], strides = [1, 1]} : vector<8x96xf32> to vector<8x32xf32>
    %45 = arith.mulf %34, %43 : vector<8x32xf32>
    %46 = arith.addf %44, %45 : vector<8x32xf32>
    %47 = math.tanh %46 : vector<8x32xf32>
    %cst_19 = arith.constant 1.000000e+00 : f32
    %48 = vector.broadcast %cst_19 : f32 to vector<8x32xf32>
    %49 = arith.subf %48, %40 : vector<8x32xf32>
    %50 = arith.mulf %49, %47 : vector<8x32xf32>
    %51 = arith.mulf %40, %18 : vector<8x32xf32>
    %52 = arith.addf %50, %51 : vector<8x32xf32>
    %c0_20 = arith.constant 0 : index
    %c0_21 = arith.constant 0 : index
    %c0_22 = arith.constant 0 : index
    %53 = vector.load %arg9[%c0_20, %c0_21, %c0_22] : memref<2x8x32xf32, #tpu.memory_space<vmem>>, vector<1x8x32xf32>
    %54 = vector.shape_cast %53 : vector<1x8x32xf32> to vector<8x32xf32>
    %55 = vector.shape_cast %52 : vector<8x32xf32> to vector<1x8x32xf32>
    tpu.vector_store %arg9[%c0_20, %c0_21, %c0_22], %55 {strides = array<i32>} : memref<2x8x32xf32, #tpu.memory_space<vmem>>, vector<1x8x32xf32>,
    %c1 = arith.constant 1 : index
    %c0_23 = arith.constant 0 : index
    %c0_24 = arith.constant 0 : index
    %56 = vector.load %arg6[%c1, %c0_23, %c0_24] : memref<2x8x32xf32, #tpu.memory_space<vmem>>, vector<1x8x32xf32>
    %57 = vector.shape_cast %56 : vector<1x8x32xf32> to vector<8x32xf32>
    %c80 = arith.constant 80 : index
    %c0_25 = arith.constant 0 : index
    %58 = vector.load %arg2[%c80, %c0_25] : memref<320x96xbf16, #tpu.memory_space<vmem>>, vector<80x96xbf16>
    %59 = arith.extf %58 : vector<80x96xbf16> to vector<80x96xf32>
    %60 = vector.extract_strided_slice %6 {offsets = [1, 0], sizes = [1, 96], strides = [1, 1]} : vector<5x128xf32> to vector<1x96xf32>
    %61 = vector.extract_strided_slice %6 {offsets = [1, 96], sizes = [1, 32], strides = [1, 1]} : vector<5x128xf32> to vector<1x32xf32>
    %62 = vector.extract_strided_slice %5 {offsets = [0, 32], sizes = [32, 32], strides = [1, 1]} : vector<32x128xf32> to vector<32x32xf32>
    %cst_26 = arith.constant 0.000000e+00 : f32
    %63 = vector.broadcast %cst_26 : f32 to vector<8x16xf32>
    %64 = tpu.concatenate %52, %63, %57 in 1 : vector<8x32xf32>, vector<8x16xf32>, vector<8x32xf32> -> vector<8x80xf32>
    %cst_27 = arith.constant dense<0.000000e+00> : vector<8x96xf32>
    %65 = tpu.matmul %64, %59, %cst_27 {dimension_numbers = #tpu.dot_dimension_numbers<[1], [0], [0], [1], [0, 0, 1, 1], [], []>} : vector<8x80xf32>, vector<80x96xf32>, vector<8x96xf32> -> vector<8x96xf32>
    %66 = vector.broadcast %60 : vector<1x96xf32> to vector<8x96xf32>
    %67 = arith.addf %65, %66 : vector<8x96xf32>
    %68 = vector.extract_strided_slice %67 {offsets = [0, 0], sizes = [8, 32], strides = [1, 1]} : vector<8x96xf32> to vector<8x32xf32>
    %69 = arith.negf %68 : vector<8x32xf32>
    %70 = math.exp %69 : vector<8x32xf32>
    %cst_28 = arith.constant 1.000000e+00 : f32
    %71 = vector.broadcast %cst_28 : f32 to vector<8x32xf32>
    %72 = arith.addf %71, %70 : vector<8x32xf32>
    %73 = arith.divf %71, %72 : vector<8x32xf32>
    %74 = vector.extract_strided_slice %67 {offsets = [0, 32], sizes = [8, 32], strides = [1, 1]} : vector<8x96xf32> to vector<8x32xf32>
    %75 = arith.negf %74 : vector<8x32xf32>
    %76 = math.exp %75 : vector<8x32xf32>
    %cst_29 = arith.constant 1.000000e+00 : f32
    %77 = vector.broadcast %cst_29 : f32 to vector<8x32xf32>
    %78 = arith.addf %77, %76 : vector<8x32xf32>
    %79 = arith.divf %77, %78 : vector<8x32xf32>
    %cst_30 = arith.constant dense<0.000000e+00> : vector<8x32xf32>
    %80 = tpu.matmul %57, %62, %cst_30 {dimension_numbers = #tpu.dot_dimension_numbers<[1], [0], [0], [1], [0, 0, 1, 1], [], []>} : vector<8x32xf32>, vector<32x32xf32>, vector<8x32xf32> -> vector<8x32xf32>
    %81 = vector.broadcast %61 : vector<1x32xf32> to vector<8x32xf32>
    %82 = arith.addf %80, %81 : vector<8x32xf32>
    %83 = vector.extract_strided_slice %67 {offsets = [0, 64], sizes = [8, 32], strides = [1, 1]} : vector<8x96xf32> to vector<8x32xf32>
    %84 = arith.mulf %73, %82 : vector<8x32xf32>
    %85 = arith.addf %83, %84 : vector<8x32xf32>
    %86 = math.tanh %85 : vector<8x32xf32>
    %cst_31 = arith.constant 1.000000e+00 : f32
    %87 = vector.broadcast %cst_31 : f32 to vector<8x32xf32>
    %88 = arith.subf %87, %79 : vector<8x32xf32>
    %89 = arith.mulf %88, %86 : vector<8x32xf32>
    %90 = arith.mulf %79, %57 : vector<8x32xf32>
    %91 = arith.addf %89, %90 : vector<8x32xf32>
    %c1_32 = arith.constant 1 : index
    %c0_33 = arith.constant 0 : index
    %c0_34 = arith.constant 0 : index
    %92 = vector.load %arg9[%c1_32, %c0_33, %c0_34] : memref<2x8x32xf32, #tpu.memory_space<vmem>>, vector<1x8x32xf32>
    %93 = vector.shape_cast %92 : vector<1x8x32xf32> to vector<8x32xf32>
    %94 = vector.shape_cast %91 : vector<8x32xf32> to vector<1x8x32xf32>
    tpu.vector_store %arg9[%c1_32, %c0_33, %c0_34], %94 {strides = array<i32>} : memref<2x8x32xf32, #tpu.memory_space<vmem>>, vector<1x8x32xf32>,
    %95 = vector.extract_strided_slice %8 {offsets = [0, 0], sizes = [32, 64], strides = [1, 1]} : vector<32x128xf32> to vector<32x64xf32>
    %cst_35 = arith.constant dense<0.000000e+00> : vector<8x64xf32>
    %96 = tpu.matmul %91, %95, %cst_35 {dimension_numbers = #tpu.dot_dimension_numbers<[1], [0], [0], [1], [0, 0, 1, 1], [], []>} : vector<8x32xf32>, vector<32x64xf32>, vector<8x64xf32> -> vector<8x64xf32>
    %97 = vector.extract_strided_slice %9 {offsets = [0, 0], sizes = [1, 64], strides = [1, 1]} : vector<1x128xf32> to vector<1x64xf32>
    %98 = vector.broadcast %97 : vector<1x64xf32> to vector<8x64xf32>
    %99 = arith.addf %96, %98 : vector<8x64xf32>
    %cst_36 = arith.constant dense<0xFF800000> : vector<8xf32>
    %100 = vector.multi_reduction <maximumf>, %99, %cst_36 [1] : vector<8x64xf32> to vector<8xf32>
    %101 = vector.shape_cast %100 : vector<8xf32> to vector<8x1xf32>
    %102 = vector.broadcast %101 : vector<8x1xf32> to vector<8x64xf32>
    %103 = arith.subf %99, %102 : vector<8x64xf32>
    %104 = math.exp %103 : vector<8x64xf32>
    %cst_37 = arith.constant dense<0.000000e+00> : vector<8xf32>
    %105 = vector.multi_reduction <add>, %104, %cst_37 [1] : vector<8x64xf32> to vector<8xf32>
    %106 = vector.shape_cast %105 : vector<8xf32> to vector<8x1xf32>
    %cst_38 = arith.constant dense<0.000000e+00> : vector<8x8xf32>
    %107 = tpu.matmul %104, %3, %cst_38 {dimension_numbers = #tpu.dot_dimension_numbers<[1], [0], [0], [1], [0, 0, 1, 1], [], []>} : vector<8x64xf32>, vector<64x8xf32>, vector<8x8xf32> -> vector<8x8xf32>
    %108 = vector.broadcast %106 : vector<8x1xf32> to vector<8x8xf32>
    %109 = arith.divf %107, %108 : vector<8x8xf32>
    %110 = tpu.concatenate %109, %91 in 1 : vector<8x8xf32>, vector<8x32xf32> -> vector<8x40xf32>
    %c0_39 = arith.constant 0 : index
    %c0_40 = arith.constant 0 : index
    %c0_41 = arith.constant 0 : index
    %111 = vector.load %arg7[%c0_39, %c0_40, %c0_41] : memref<2x8x32xf32, #tpu.memory_space<vmem>>, vector<1x8x32xf32>
    %112 = vector.shape_cast %111 : vector<1x8x32xf32> to vector<8x32xf32>
    %c160 = arith.constant 160 : index
    %c0_42 = arith.constant 0 : index
    %113 = vector.load %arg2[%c160, %c0_42] : memref<320x96xbf16, #tpu.memory_space<vmem>>, vector<80x96xbf16>
    %114 = arith.extf %113 : vector<80x96xbf16> to vector<80x96xf32>
    %115 = vector.extract_strided_slice %6 {offsets = [2, 0], sizes = [1, 96], strides = [1, 1]} : vector<5x128xf32> to vector<1x96xf32>
    %116 = vector.extract_strided_slice %6 {offsets = [2, 96], sizes = [1, 32], strides = [1, 1]} : vector<5x128xf32> to vector<1x32xf32>
    %117 = vector.extract_strided_slice %5 {offsets = [0, 64], sizes = [32, 32], strides = [1, 1]} : vector<32x128xf32> to vector<32x32xf32>
    %cst_43 = arith.constant 0.000000e+00 : f32
    %118 = vector.broadcast %cst_43 : f32 to vector<8x8xf32>
    %119 = tpu.concatenate %110, %118, %112 in 1 : vector<8x40xf32>, vector<8x8xf32>, vector<8x32xf32> -> vector<8x80xf32>
    %cst_44 = arith.constant dense<0.000000e+00> : vector<8x96xf32>
    %120 = tpu.matmul %119, %114, %cst_44 {dimension_numbers = #tpu.dot_dimension_numbers<[1], [0], [0], [1], [0, 0, 1, 1], [], []>} : vector<8x80xf32>, vector<80x96xf32>, vector<8x96xf32> -> vector<8x96xf32>
    %121 = vector.broadcast %115 : vector<1x96xf32> to vector<8x96xf32>
    %122 = arith.addf %120, %121 : vector<8x96xf32>
    %123 = vector.extract_strided_slice %122 {offsets = [0, 0], sizes = [8, 32], strides = [1, 1]} : vector<8x96xf32> to vector<8x32xf32>
    %124 = arith.negf %123 : vector<8x32xf32>
    %125 = math.exp %124 : vector<8x32xf32>
    %cst_45 = arith.constant 1.000000e+00 : f32
    %126 = vector.broadcast %cst_45 : f32 to vector<8x32xf32>
    %127 = arith.addf %126, %125 : vector<8x32xf32>
    %128 = arith.divf %126, %127 : vector<8x32xf32>
    %129 = vector.extract_strided_slice %122 {offsets = [0, 32], sizes = [8, 32], strides = [1, 1]} : vector<8x96xf32> to vector<8x32xf32>
    %130 = arith.negf %129 : vector<8x32xf32>
    %131 = math.exp %130 : vector<8x32xf32>
    %cst_46 = arith.constant 1.000000e+00 : f32
    %132 = vector.broadcast %cst_46 : f32 to vector<8x32xf32>
    %133 = arith.addf %132, %131 : vector<8x32xf32>
    %134 = arith.divf %132, %133 : vector<8x32xf32>
    %cst_47 = arith.constant dense<0.000000e+00> : vector<8x32xf32>
    %135 = tpu.matmul %112, %117, %cst_47 {dimension_numbers = #tpu.dot_dimension_numbers<[1], [0], [0], [1], [0, 0, 1, 1], [], []>} : vector<8x32xf32>, vector<32x32xf32>, vector<8x32xf32> -> vector<8x32xf32>
    %136 = vector.broadcast %116 : vector<1x32xf32> to vector<8x32xf32>
    %137 = arith.addf %135, %136 : vector<8x32xf32>
    %138 = vector.extract_strided_slice %122 {offsets = [0, 64], sizes = [8, 32], strides = [1, 1]} : vector<8x96xf32> to vector<8x32xf32>
    %139 = arith.mulf %128, %137 : vector<8x32xf32>
    %140 = arith.addf %138, %139 : vector<8x32xf32>
    %141 = math.tanh %140 : vector<8x32xf32>
    %cst_48 = arith.constant 1.000000e+00 : f32
    %142 = vector.broadcast %cst_48 : f32 to vector<8x32xf32>
    %143 = arith.subf %142, %134 : vector<8x32xf32>
    %144 = arith.mulf %143, %141 : vector<8x32xf32>
    %145 = arith.mulf %134, %112 : vector<8x32xf32>
    %146 = arith.addf %144, %145 : vector<8x32xf32>
    %c0_49 = arith.constant 0 : index
    %c0_50 = arith.constant 0 : index
    %c0_51 = arith.constant 0 : index
    %147 = vector.load %arg10[%c0_49, %c0_50, %c0_51] : memref<2x8x32xf32, #tpu.memory_space<vmem>>, vector<1x8x32xf32>
    %148 = vector.shape_cast %147 : vector<1x8x32xf32> to vector<8x32xf32>
    %149 = vector.shape_cast %146 : vector<8x32xf32> to vector<1x8x32xf32>
    tpu.vector_store %arg10[%c0_49, %c0_50, %c0_51], %149 {strides = array<i32>} : memref<2x8x32xf32, #tpu.memory_space<vmem>>, vector<1x8x32xf32>,
    %c1_52 = arith.constant 1 : index
    %c0_53 = arith.constant 0 : index
    %c0_54 = arith.constant 0 : index
    %150 = vector.load %arg7[%c1_52, %c0_53, %c0_54] : memref<2x8x32xf32, #tpu.memory_space<vmem>>, vector<1x8x32xf32>
    %151 = vector.shape_cast %150 : vector<1x8x32xf32> to vector<8x32xf32>
    %c240 = arith.constant 240 : index
    %c0_55 = arith.constant 0 : index
    %152 = vector.load %arg2[%c240, %c0_55] : memref<320x96xbf16, #tpu.memory_space<vmem>>, vector<80x96xbf16>
    %153 = arith.extf %152 : vector<80x96xbf16> to vector<80x96xf32>
    %154 = vector.extract_strided_slice %6 {offsets = [3, 0], sizes = [1, 96], strides = [1, 1]} : vector<5x128xf32> to vector<1x96xf32>
    %155 = vector.extract_strided_slice %6 {offsets = [3, 96], sizes = [1, 32], strides = [1, 1]} : vector<5x128xf32> to vector<1x32xf32>
    %156 = vector.extract_strided_slice %5 {offsets = [0, 96], sizes = [32, 32], strides = [1, 1]} : vector<32x128xf32> to vector<32x32xf32>
    %cst_56 = arith.constant 0.000000e+00 : f32
    %157 = vector.broadcast %cst_56 : f32 to vector<8x16xf32>
    %158 = tpu.concatenate %146, %157, %151 in 1 : vector<8x32xf32>, vector<8x16xf32>, vector<8x32xf32> -> vector<8x80xf32>
    %cst_57 = arith.constant dense<0.000000e+00> : vector<8x96xf32>
    %159 = tpu.matmul %158, %153, %cst_57 {dimension_numbers = #tpu.dot_dimension_numbers<[1], [0], [0], [1], [0, 0, 1, 1], [], []>} : vector<8x80xf32>, vector<80x96xf32>, vector<8x96xf32> -> vector<8x96xf32>
    %160 = vector.broadcast %154 : vector<1x96xf32> to vector<8x96xf32>
    %161 = arith.addf %159, %160 : vector<8x96xf32>
    %162 = vector.extract_strided_slice %161 {offsets = [0, 0], sizes = [8, 32], strides = [1, 1]} : vector<8x96xf32> to vector<8x32xf32>
    %163 = arith.negf %162 : vector<8x32xf32>
    %164 = math.exp %163 : vector<8x32xf32>
    %cst_58 = arith.constant 1.000000e+00 : f32
    %165 = vector.broadcast %cst_58 : f32 to vector<8x32xf32>
    %166 = arith.addf %165, %164 : vector<8x32xf32>
    %167 = arith.divf %165, %166 : vector<8x32xf32>
    %168 = vector.extract_strided_slice %161 {offsets = [0, 32], sizes = [8, 32], strides = [1, 1]} : vector<8x96xf32> to vector<8x32xf32>
    %169 = arith.negf %168 : vector<8x32xf32>
    %170 = math.exp %169 : vector<8x32xf32>
    %cst_59 = arith.constant 1.000000e+00 : f32
    %171 = vector.broadcast %cst_59 : f32 to vector<8x32xf32>
    %172 = arith.addf %171, %170 : vector<8x32xf32>
    %173 = arith.divf %171, %172 : vector<8x32xf32>
    %cst_60 = arith.constant dense<0.000000e+00> : vector<8x32xf32>
    %174 = tpu.matmul %151, %156, %cst_60 {dimension_numbers = #tpu.dot_dimension_numbers<[1], [0], [0], [1], [0, 0, 1, 1], [], []>} : vector<8x32xf32>, vector<32x32xf32>, vector<8x32xf32> -> vector<8x32xf32>
    %175 = vector.broadcast %155 : vector<1x32xf32> to vector<8x32xf32>
    %176 = arith.addf %174, %175 : vector<8x32xf32>
    %177 = vector.extract_strided_slice %161 {offsets = [0, 64], sizes = [8, 32], strides = [1, 1]} : vector<8x96xf32> to vector<8x32xf32>
    %178 = arith.mulf %167, %176 : vector<8x32xf32>
    %179 = arith.addf %177, %178 : vector<8x32xf32>
    %180 = math.tanh %179 : vector<8x32xf32>
    %cst_61 = arith.constant 1.000000e+00 : f32
    %181 = vector.broadcast %cst_61 : f32 to vector<8x32xf32>
    %182 = arith.subf %181, %173 : vector<8x32xf32>
    %183 = arith.mulf %182, %180 : vector<8x32xf32>
    %184 = arith.mulf %173, %151 : vector<8x32xf32>
    %185 = arith.addf %183, %184 : vector<8x32xf32>
    %c1_62 = arith.constant 1 : index
    %c0_63 = arith.constant 0 : index
    %c0_64 = arith.constant 0 : index
    %186 = vector.load %arg10[%c1_62, %c0_63, %c0_64] : memref<2x8x32xf32, #tpu.memory_space<vmem>>, vector<1x8x32xf32>
    %187 = vector.shape_cast %186 : vector<1x8x32xf32> to vector<8x32xf32>
    %188 = vector.shape_cast %185 : vector<8x32xf32> to vector<1x8x32xf32>
    tpu.vector_store %arg10[%c1_62, %c0_63, %c0_64], %188 {strides = array<i32>} : memref<2x8x32xf32, #tpu.memory_space<vmem>>, vector<1x8x32xf32>,
    %189 = vector.extract_strided_slice %8 {offsets = [0, 64], sizes = [32, 64], strides = [1, 1]} : vector<32x128xf32> to vector<32x64xf32>
    %cst_65 = arith.constant dense<0.000000e+00> : vector<8x64xf32>
    %190 = tpu.matmul %185, %189, %cst_65 {dimension_numbers = #tpu.dot_dimension_numbers<[1], [0], [0], [1], [0, 0, 1, 1], [], []>} : vector<8x32xf32>, vector<32x64xf32>, vector<8x64xf32> -> vector<8x64xf32>
    %191 = vector.extract_strided_slice %9 {offsets = [0, 64], sizes = [1, 64], strides = [1, 1]} : vector<1x128xf32> to vector<1x64xf32>
    %192 = vector.broadcast %191 : vector<1x64xf32> to vector<8x64xf32>
    %193 = arith.addf %190, %192 : vector<8x64xf32>
    %194 = tpu.concatenate %99, %193 in 1 : vector<8x64xf32>, vector<8x64xf32> -> vector<8x128xf32>
    %c0_66 = arith.constant 0 : index
    %c0_67 = arith.constant 0 : index
    %195 = vector.load %arg8[%c0_66, %c0_67] : memref<8x128xf32, #tpu.memory_space<vmem>>, vector<8x128xf32>
    tpu.vector_store %arg8[%c0_66, %c0_67], %194 {strides = array<i32>} : memref<8x128xf32, #tpu.memory_space<vmem>>, vector<8x128xf32>,
    return
  }
}

</mosaic_0001>

<llo_original>
// kernel: decoder_forward.1
$region0: #{decoder_forward.1}
  #allocation0 [shape = 'u32[]', space=smem, size = 0x4, offset = 0x4, fixed_abs, tag = 'smem constant byte address 0x4 - core index']
  #allocation1 [shape = 'u32[144,128]{1,0:T(1,128)}', space=vmem, size = 0x12000, scoped, tag = 'internal scratch']
  %s0 = inlined_call_operand.vmem [shape: s32[8,1], index: 0, kind: input, shape index: {}]
  %s1 = inlined_call_operand.vmem [shape: bf16[64,24], index: 1, kind: input, shape index: {}]
  %s2 = inlined_call_operand.vmem [shape: bf16[320,96], index: 2, kind: input, shape index: {}]
  %s3 = inlined_call_operand.vmem [shape: bf16[32,128], index: 3, kind: input, shape index: {}]
  %s4 = inlined_call_operand.vmem [shape: f32[5,128], index: 4, kind: input, shape index: {}]
  %s5 = inlined_call_operand.vmem [shape: bf16[32,128], index: 5, kind: input, shape index: {}]
  %s6 = inlined_call_operand.vmem [shape: f32[2,8,32], index: 6, kind: input, shape index: {}, may-alias: {6,9}]
  %s7 = inlined_call_operand.vmem [shape: f32[2,8,32], index: 7, kind: input, shape index: {}, may-alias: {7,10}]
  %s8 = inlined_call_operand.vmem [shape: f32[8,128], index: 8, kind: output, shape index: {0}]
  %s9 = inlined_call_operand.vmem [shape: f32[2,8,32], index: 9, kind: output, shape index: {1}, may-alias: {6,9}]
  %s10 = inlined_call_operand.vmem [shape: f32[2,8,32], index: 10, kind: output, shape index: {2}, may-alias: {7,10}]
  %11 = xla_tuple %s8, %s9, %s10
  %s12 = sld [smem:[#allocation0]]
  $region58: #{decoder_forward.1} parent=0
    _
  %s14 = ssub.s32 1, %s12
  %s15 = scalar_select 0, %s14, %s12
  // Predicated region
  $region2: #{decoder_forward.1} parent=0 // pred_check
    _
  $region3: #{decoder_forward.1} parent=0 // pred_check_branch
    %17 = sbr.rel (0) target = $region5
  $region4: #{decoder_forward.1} parent=0 // pred_region
    _
  $region5: #{decoder_forward.1} parent=0 // pred_fallthru
    _
  // Predicated region
  $region6: #{decoder_forward.1} parent=0 // pred_check
    _
  $region7: #{decoder_forward.1} parent=0 // pred_check_branch
    %19 = sbr.rel (0) target = $region9
  $region8: #{decoder_forward.1} parent=0 // pred_region
    _
  $region9: #{decoder_forward.1} parent=0 // pred_fallthru
    _
  // Predicated region
  $region10: #{decoder_forward.1} parent=0 // pred_check
    _
  $region11: #{decoder_forward.1} parent=0 // pred_check_branch
    %21 = sbr.rel (0) target = $region13
  $region12: #{decoder_forward.1} parent=0 // pred_region
    _
  $region13: #{decoder_forward.1} parent=0 // pred_fallthru
    _
  // Predicated region
  $region14: #{decoder_forward.1} parent=0 // pred_check
    _
  $region15: #{decoder_forward.1} parent=0 // pred_check_branch
    %23 = sbr.rel (0) target = $region17
  $region16: #{decoder_forward.1} parent=0 // pred_region
    _
  $region17: #{decoder_forward.1} parent=0 // pred_fallthru
    _
  // Predicated region
  $region18: #{decoder_forward.1} parent=0 // pred_check
    _
  $region19: #{decoder_forward.1} parent=0 // pred_check_branch
    %25 = sbr.rel (0) target = $region21
  $region20: #{decoder_forward.1} parent=0 // pred_region
    _
  $region21: #{decoder_forward.1} parent=0 // pred_fallthru
    _
  // Predicated region
  $region22: #{decoder_forward.1} parent=0 // pred_check
    _
  $region23: #{decoder_forward.1} parent=0 // pred_check_branch
    %27 = sbr.rel (0) target = $region25
  $region24: #{decoder_forward.1} parent=0 // pred_region
    _
  $region25: #{decoder_forward.1} parent=0 // pred_fallthru
    _
  // Predicated region
  $region26: #{decoder_forward.1} parent=0 // pred_check
    _
  $region27: #{decoder_forward.1} parent=0 // pred_check_branch
    %29 = sbr.rel (0) target = $region29
  $region28: #{decoder_forward.1} parent=0 // pred_region
    _
  $region29: #{decoder_forward.1} parent=0 // pred_fallthru
    _
  // Predicated region
  $region30: #{decoder_forward.1} parent=0 // pred_check
    _
  $region31: #{decoder_forward.1} parent=0 // pred_check_branch
    %31 = sbr.rel (0) target = $region33
  $region32: #{decoder_forward.1} parent=0 // pred_region
    _
  $region33: #{decoder_forward.1} parent=0 // pred_fallthru
    _
  %v32 = vld [vmem:[%s1] sm:$0xf]
  %v33 = vld [vmem:[%s1 + $0x4] sm:$0xf]
  %v34 = vld [vmem:[%s1 + $0x8] sm:$0xf]
  %v35 = vld [vmem:[%s1 + $0xc] sm:$0xf]
  %v36 = vld [vmem:[%s1 + $0x10] sm:$0xf]
  %v37 = vld [vmem:[%s1 + $0x14] sm:$0xf]
  %v38 = vld [vmem:[%s1 + $0x18] sm:$0xf]
  %v39 = vld [vmem:[%s1 + $0x1c] sm:$0xf]
  %v40 = vunpack.c.l.bf16 %v32
  %v41 = vunpack.c.l.bf16 %v33
  %v42 = vunpack.c.l.bf16 %v34
  %v43 = vunpack.c.l.bf16 %v35
  %v44 = vunpack.c.l.bf16 %v36
  %v45 = vunpack.c.l.bf16 %v37
  %v46 = vunpack.c.l.bf16 %v38
  %v47 = vunpack.c.l.bf16 %v39
  %v48 = vld [vmem:[%s3] sm:$0xf]
  %v49 = vld [vmem:[%s3 + $0x4] sm:$0xf]
  %v50 = vld [vmem:[%s3 + $0x8] sm:$0xf]
  %v51 = vld [vmem:[%s3 + $0xc] sm:$0xf]
  %v52 = vunpack.c.l.bf16 %v48
  %v53 = vunpack.c.l.bf16 %v49
  %v54 = vunpack.c.l.bf16 %v50
  %v55 = vunpack.c.l.bf16 %v51
  %v56 = vld [vmem:[%s4] sm:$0x1f]
  %v57 = vld [vmem:[%s5] sm:$0xf]
  %v58 = vld [vmem:[%s5 + $0x4] sm:$0xf]
  %v59 = vld [vmem:[%s5 + $0x8] sm:$0xf]
  %v60 = vld [vmem:[%s5 + $0xc] sm:$0xf]
  %v61 = vunpack.c.l.bf16 %v57
  %v62 = vunpack.c.l.bf16 %v58
  %v63 = vunpack.c.l.bf16 %v59
  %v64 = vunpack.c.l.bf16 %v60
  %v65 = vld [vmem:[%s0] sm:$0xff]
  %v66 = vlaneseq
  %v67 = vand.u32 %v66, 127
  %68 = vset.pattern.permute.xlu0 0
  %69 = vperm.xlu0 %68, %v65
  %v70 = vpop.permute.xlu0 %69
  %vm71 = vcmp.eq.s32.totalorder %v67, %v70
  %v72 = vsel %vm71, 1, 0
  %v73 = vcvt.s32.f32 %v72
  %vm74 = vcmask 523264
  %v76 = vsel %vm74, %v73, 0
  %78 = vmatprep.subr.mxu0 0.0
  %79 = vmatpush1.msra.mxu0 0.0
  %80 = vmatprep.subr.mxu0 0.0
  %81 = vmatpush1.msra.mxu0 0.0
  %82 = vmatprep.subr.mxu0 0.0
  %83 = vmatpush1.msra.mxu0 0.0
  %84 = vmatprep.subr.mxu0 0.0
  %85 = vmatpush1.msra.mxu0 0.0
  %86 = vmatprep.subr.mxu0 0.0
  %87 = vmatpush1.msra.mxu0 0.0
  %88 = vmatprep.subr.mxu0 0.0
  %89 = vmatpush1.msra.mxu0 0.0
  %90 = vmatprep.subr.mxu0 0.0
  %91 = vmatpush1.msra.mxu0 0.0
  %92 = vmatprep.subr.mxu0 0.0
  %93 = vmatpush1.msra.mxu0 0.0
  %94 = vmatprep.subr.mxu0 0.0
  %95 = vmatpush1.msra.mxu0 %v47
  %96 = vmatprep.subr.mxu0 0.0
  %97 = vmatpush1.msra.mxu0 %v46
  %98 = vmatprep.subr.mxu0 0.0
  %99 = vmatpush1.msra.mxu0 %v45
  %100 = vmatprep.subr.mxu0 0.0
  %101 = vmatpush1.msra.mxu0 %v44
  %102 = vmatprep.subr.mxu0 0.0
  %103 = vmatpush1.msra.mxu0 %v43
  %104 = vmatprep.subr.mxu0 0.0
  %105 = vmatpush1.msra.mxu0 %v42
  %106 = vmatprep.subr.mxu0 0.0
  %107 = vmatpush1.msra.mxu0 %v41
  %108 = vmatprep.subr.mxu0 0.0
  %109 = vmatpush1.msra.mxu0 %v40
  %110 = vmatprep.subr.mxu0 0.0
  %111 = vmatpush2.msra.mxu0 0.0
  %112 = vmatprep.subr.mxu0 0.0
  %113 = vmatpush2.msra.mxu0 0.0
  %114 = vmatprep.subr.mxu0 0.0
  %115 = vmatpush2.msra.mxu0 0.0
  %116 = vmatprep.subr.mxu0 0.0
  %117 = vmatpush2.msra.mxu0 0.0
  %118 = vmatprep.subr.mxu0 0.0
  %119 = vmatpush2.msra.mxu0 0.0
  %120 = vmatprep.subr.mxu0 0.0
  %121 = vmatpush2.msra.mxu0 0.0
  %122 = vmatprep.subr.mxu0 0.0
  %123 = vmatpush2.msra.mxu0 0.0
  %124 = vmatprep.subr.mxu0 0.0
  %125 = vmatpush2.msra.mxu0 0.0
  %126 = vmatprep.subr.mxu0 0.0
  %127 = vmatpush2.msra.mxu0 0.0
  %128 = vmatprep.subr.mxu0 0.0
  %129 = vmatpush2.msra.mxu0 0.0
  %130 = vmatprep.subr.mxu0 0.0
  %131 = vmatpush2.msra.mxu0 0.0
  %132 = vmatprep.subr.mxu0 0.0
  %133 = vmatpush2.msra.mxu0 0.0
  %134 = vmatprep.subr.mxu0 0.0
  %135 = vmatpush2.msra.mxu0 0.0
  %136 = vmatprep.subr.mxu0 0.0
  %137 = vmatpush2.msra.mxu0 0.0
  %138 = vmatprep.subr.mxu0 0.0
  %139 = vmatpush2.msra.mxu0 0.0
  %140 = vmatprep.subr.mxu0 0.0
  %141 = vmatpush2.msra.mxu0 0.0
  %142 = vmatprep.mubr.f32.mxu0 0.0
  %143 = vmatmul.mubr.f32.gmra.mxu0 %v76
  %v144 = vpop.f32.mrf.mxu0
  %v145 = vadd.f32 0.0, %v144
  %v146 = vpop.f32.mrf.mxu0
  %147 = vdwg.mxu0
  %v148 = vld [vmem:[%s6] sm:$0xff]
  %v149 = vld [vmem:[%s2] sm:$0xf]
  %v150 = vld [vmem:[%s2 + $0x4] sm:$0xf]
  %v151 = vld [vmem:[%s2 + $0x8] sm:$0xf]
  %v152 = vld [vmem:[%s2 + $0xc] sm:$0xf]
  %v153 = vld [vmem:[%s2 + $0x10] sm:$0xf]
  %v154 = vld [vmem:[%s2 + $0x14] sm:$0xf]
  %v155 = vld [vmem:[%s2 + $0x18] sm:$0xf]
  %v156 = vld [vmem:[%s2 + $0x1c] sm:$0xf]
  %v157 = vld [vmem:[%s2 + $0x20] sm:$0xf]
  %v158 = vld [vmem:[%s2 + $0x24] sm:$0xf]
  %v159 = vunpack.c.l.bf16 %v149
  %v160 = vunpack.c.l.bf16 %v150
  %v161 = vunpack.c.l.bf16 %v151
  %v162 = vunpack.c.l.bf16 %v152
  %v163 = vunpack.c.l.bf16 %v153
  %v164 = vunpack.c.l.bf16 %v154
  %v165 = vunpack.c.l.bf16 %v155
  %v166 = vunpack.c.l.bf16 %v156
  %v167 = vunpack.c.l.bf16 %v157
  %v168 = vunpack.c.l.bf16 %v158
  %170 = vrot.lane.b32.xlu0 %v148, 48
  %v171 = vpop.permute.xlu0 %170
  %vm173 = vcmask 130048
  %v174 = vsel %vm173, %v145, 0.0
  %vm175 = vcmask 392192
  %v176 = vsel %vm175, %v174, %v171
  %v177 = vlaneseq
  %v178 = vshrl.u32 %v177, 7
  %v179 = vsub.s32 0, %v178
  %v180 = vrot.slane %v56, %v179
  %vm181 = vcmask 654336
  %v183 = vsel %vm181, %v176, 0
  %185 = vmatprep.subr.mxu0 0.0
  %186 = vmatpush1.msra.mxu0 0.0
  %187 = vmatprep.subr.mxu0 0.0
  %188 = vmatpush1.msra.mxu0 0.0
  %189 = vmatprep.subr.mxu0 0.0
  %190 = vmatpush1.msra.mxu0 0.0
  %191 = vmatprep.subr.mxu0 0.0
  %192 = vmatpush1.msra.mxu0 0.0
  %193 = vmatprep.subr.mxu0 0.0
  %194 = vmatpush1.msra.mxu0 0.0
  %195 = vmatprep.subr.mxu0 0.0
  %196 = vmatpush1.msra.mxu0 0.0
  %197 = vmatprep.subr.mxu0 0.0
  %198 = vmatpush1.msra.mxu0 %v168
  %199 = vmatprep.subr.mxu0 0.0
  %200 = vmatpush1.msra.mxu0 %v167
  %201 = vmatprep.subr.mxu0 0.0
  %202 = vmatpush1.msra.mxu0 %v166
  %203 = vmatprep.subr.mxu0 0.0
  %204 = vmatpush1.msra.mxu0 %v165
  %205 = vmatprep.subr.mxu0 0.0
  %206 = vmatpush1.msra.mxu0 %v164
  %207 = vmatprep.subr.mxu0 0.0
  %208 = vmatpush1.msra.mxu0 %v163
  %209 = vmatprep.subr.mxu0 0.0
  %210 = vmatpush1.msra.mxu0 %v162
  %211 = vmatprep.subr.mxu0 0.0
  %212 = vmatpush1.msra.mxu0 %v161
  %213 = vmatprep.subr.mxu0 0.0
  %214 = vmatpush1.msra.mxu0 %v160
  %215 = vmatprep.subr.mxu0 0.0
  %216 = vmatpush1.msra.mxu0 %v159
  %217 = vmatprep.subr.mxu0 0.0
  %218 = vmatpush2.msra.mxu0 0.0
  %219 = vmatprep.subr.mxu0 0.0
  %220 = vmatpush2.msra.mxu0 0.0
  %221 = vmatprep.subr.mxu0 0.0
  %222 = vmatpush2.msra.mxu0 0.0
  %223 = vmatprep.subr.mxu0 0.0
  %224 = vmatpush2.msra.mxu0 0.0
  %225 = vmatprep.subr.mxu0 0.0
  %226 = vmatpush2.msra.mxu0 0.0
  %227 = vmatprep.subr.mxu0 0.0
  %228 = vmatpush2.msra.mxu0 0.0
  %229 = vmatprep.subr.mxu0 0.0
  %230 = vmatpush2.msra.mxu0 0.0
  %231 = vmatprep.subr.mxu0 0.0
  %232 = vmatpush2.msra.mxu0 0.0
  %233 = vmatprep.subr.mxu0 0.0
  %234 = vmatpush2.msra.mxu0 0.0
  %235 = vmatprep.subr.mxu0 0.0
  %236 = vmatpush2.msra.mxu0 0.0
  %237 = vmatprep.subr.mxu0 0.0
  %238 = vmatpush2.msra.mxu0 0.0
  %239 = vmatprep.subr.mxu0 0.0
  %240 = vmatpush2.msra.mxu0 0.0
  %241 = vmatprep.subr.mxu0 0.0
  %242 = vmatpush2.msra.mxu0 0.0
  %243 = vmatprep.subr.mxu0 0.0
  %244 = vmatpush2.msra.mxu0 0.0
  %245 = vmatprep.subr.mxu0 0.0
  %246 = vmatpush2.msra.mxu0 0.0
  %247 = vmatprep.subr.mxu0 0.0
  %248 = vmatpush2.msra.mxu0 0.0
  %249 = vmatprep.mubr.f32.mxu0 0.0
  %250 = vmatmul.mubr.f32.gmra.mxu0 %v183
  %v251 = vpop.f32.mrf.mxu0
  %v252 = vadd.f32 %v180, %v251
  %v253 = vpop.f32.mrf.mxu0
  %254 = vdwg.mxu0
  %v255 = vxor.u32 %v252, 2147483648
  %v256 = vmul.f32 %v255, 1.442695
  %v257 = vpow.pop %v256
  %v258 = vadd.f32 %v257, 1.0
  %v259 = vrcp.pop %v258
  %v260 = vmul.f32 1.0, %v259
  %262 = vrot.lane.b32.xlu0 %v180, 32
  %v263 = vpop.permute.xlu0 %262
  %vm265 = vcmask 261120
  %v266 = vsel %vm265, %v148, 0
  %268 = vmatprep.subr.mxu0 0.0
  %269 = vmatpush1.msra.mxu0 0.0
  %270 = vmatprep.subr.mxu0 0.0
  %271 = vmatpush1.msra.mxu0 0.0
  %272 = vmatprep.subr.mxu0 0.0
  %273 = vmatpush1.msra.mxu0 0.0
  %274 = vmatprep.subr.mxu0 0.0
  %275 = vmatpush1.msra.mxu0 0.0
  %276 = vmatprep.subr.mxu0 0.0
  %277 = vmatpush1.msra.mxu0 0.0
  %278 = vmatprep.subr.mxu0 0.0
  %279 = vmatpush1.msra.mxu0 0.0
  %280 = vmatprep.subr.mxu0 0.0
  %281 = vmatpush1.msra.mxu0 0.0
  %282 = vmatprep.subr.mxu0 0.0
  %283 = vmatpush1.msra.mxu0 0.0
  %284 = vmatprep.subr.mxu0 0.0
  %285 = vmatpush1.msra.mxu0 0.0
  %286 = vmatprep.subr.mxu0 0.0
  %287 = vmatpush1.msra.mxu0 0.0
  %288 = vmatprep.subr.mxu0 0.0
  %289 = vmatpush1.msra.mxu0 0.0
  %290 = vmatprep.subr.mxu0 0.0
  %291 = vmatpush1.msra.mxu0 0.0
  %292 = vmatprep.subr.mxu0 0.0
  %293 = vmatpush1.msra.mxu0 %v55
  %294 = vmatprep.subr.mxu0 0.0
  %295 = vmatpush1.msra.mxu0 %v54
  %296 = vmatprep.subr.mxu0 0.0
  %297 = vmatpush1.msra.mxu0 %v53
  %298 = vmatprep.subr.mxu0 0.0
  %299 = vmatpush1.msra.mxu0 %v52
  %300 = vmatprep.subr.mxu0 0.0
  %301 = vmatpush2.msra.mxu0 0.0
  %302 = vmatprep.subr.mxu0 0.0
  %303 = vmatpush2.msra.mxu0 0.0
  %304 = vmatprep.subr.mxu0 0.0
  %305 = vmatpush2.msra.mxu0 0.0
  %306 = vmatprep.subr.mxu0 0.0
  %307 = vmatpush2.msra.mxu0 0.0
  %308 = vmatprep.subr.mxu0 0.0
  %309 = vmatpush2.msra.mxu0 0.0
  %310 = vmatprep.subr.mxu0 0.0
  %311 = vmatpush2.msra.mxu0 0.0
  %312 = vmatprep.subr.mxu0 0.0
  %313 = vmatpush2.msra.mxu0 0.0
  %314 = vmatprep.subr.mxu0 0.0
  %315 = vmatpush2.msra.mxu0 0.0
  %316 = vmatprep.subr.mxu0 0.0
  %317 = vmatpush2.msra.mxu0 0.0
  %318 = vmatprep.subr.mxu0 0.0
  %319 = vmatpush2.msra.mxu0 0.0
  %320 = vmatprep.subr.mxu0 0.0
  %321 = vmatpush2.msra.mxu0 0.0
  %322 = vmatprep.subr.mxu0 0.0
  %323 = vmatpush2.msra.mxu0 0.0
  %324 = vmatprep.subr.mxu0 0.0
  %325 = vmatpush2.msra.mxu0 0.0
  %326 = vmatprep.subr.mxu0 0.0
  %327 = vmatpush2.msra.mxu0 0.0
  %328 = vmatprep.subr.mxu0 0.0
  %329 = vmatpush2.msra.mxu0 0.0
  %330 = vmatprep.subr.mxu0 0.0
  %331 = vmatpush2.msra.mxu0 0.0
  %332 = vmatprep.mubr.f32.mxu0 0.0
  %333 = vmatmul.mubr.f32.gmra.mxu0 %v266
  %v334 = vpop.f32.mrf.mxu0
  %v335 = vadd.f32 %v263, %v334
  %v336 = vpop.f32.mrf.mxu0
  %337 = vdwg.mxu0
  %v338 = vmul.f32 %v260, %v335
  %340 = vrot.lane.b32.xlu0 %v338, 64
  %v341 = vpop.permute.xlu0 %340
  %v343 = vadd.f32 %v252, %v341
  %v344 = vtanh.pop %v343
  %v345 = vsub.f32 1.0, %v260
  %347 = vrot.lane.b32.xlu0 %v344, 96
  %v348 = vpop.permute.xlu0 %347
  %v350 = vmul.f32 %v345, %v348
  %351 = vrot.lane.b32.xlu0 %v148, 32
  %v352 = vpop.permute.xlu0 %351
  %v354 = vmul.f32 %v260, %v352
  %v355 = vadd.f32 %v350, %v354
  %357 = vrot.lane.b32.xlu0 %v355, 96
  %v358 = vpop.permute.xlu0 %357
  %360 = vst.msk [vmem:[%s9] sm:$0xff] %vm265, %v358
  %s361 = scalar_lea.vmem %s6, 8
  %v362 = vld [vmem:[%s361] sm:$0xff]
  %v363 = vld [vmem:[%s2 + $0x28] sm:$0xf]
  %v364 = vld [vmem:[%s2 + $0x2c] sm:$0xf]
  %v365 = vld [vmem:[%s2 + $0x30] sm:$0xf]
  %v366 = vld [vmem:[%s2 + $0x34] sm:$0xf]
  %v367 = vld [vmem:[%s2 + $0x38] sm:$0xf]
  %v368 = vld [vmem:[%s2 + $0x3c] sm:$0xf]
  %v369 = vld [vmem:[%s2 + $0x40] sm:$0xf]
  %v370 = vld [vmem:[%s2 + $0x44] sm:$0xf]
  %v371 = vld [vmem:[%s2 + $0x48] sm:$0xf]
  %v372 = vld [vmem:[%s2 + $0x4c] sm:$0xf]
  %v373 = vunpack.c.l.bf16 %v363
  %v374 = vunpack.c.l.bf16 %v364
  %v375 = vunpack.c.l.bf16 %v365
  %v376 = vunpack.c.l.bf16 %v366
  %v377 = vunpack.c.l.bf16 %v367
  %v378 = vunpack.c.l.bf16 %v368
  %v379 = vunpack.c.l.bf16 %v369
  %v380 = vunpack.c.l.bf16 %v370
  %v381 = vunpack.c.l.bf16 %v371
  %v382 = vunpack.c.l.bf16 %v372
  %384 = vrot.lane.b32.xlu0 %v362, 48
  %v385 = vpop.permute.xlu0 %384
  %v387 = vsel %vm265, %v358, 0.0
  %v388 = vsel %vm175, %v387, %v385
  %v389 = vlaneseq
  %v390 = vshrl.u32 %v389, 7
  %v391 = vsub.s32 1, %v390
  %v392 = vrot.slane %v56, %v391
  %v394 = vsel %vm181, %v388, 0
  %396 = vmatprep.subr.mxu0 0.0
  %397 = vmatpush1.msra.mxu0 0.0
  %398 = vmatprep.subr.mxu0 0.0
  %399 = vmatpush1.msra.mxu0 0.0
  %400 = vmatprep.subr.mxu0 0.0
  %401 = vmatpush1.msra.mxu0 0.0
  %402 = vmatprep.subr.mxu0 0.0
  %403 = vmatpush1.msra.mxu0 0.0
  %404 = vmatprep.subr.mxu0 0.0
  %405 = vmatpush1.msra.mxu0 0.0
  %406 = vmatprep.subr.mxu0 0.0
  %407 = vmatpush1.msra.mxu0 0.0
  %408 = vmatprep.subr.mxu0 0.0
  %409 = vmatpush1.msra.mxu0 %v382
  %410 = vmatprep.subr.mxu0 0.0
  %411 = vmatpush1.msra.mxu0 %v381
  %412 = vmatprep.subr.mxu0 0.0
  %413 = vmatpush1.msra.mxu0 %v380
  %414 = vmatprep.subr.mxu0 0.0
  %415 = vmatpush1.msra.mxu0 %v379
  %416 = vmatprep.subr.mxu0 0.0
  %417 = vmatpush1.msra.mxu0 %v378
  %418 = vmatprep.subr.mxu0 0.0
  %419 = vmatpush1.msra.mxu0 %v377
  %420 = vmatprep.subr.mxu0 0.0
  %421 = vmatpush1.msra.mxu0 %v376
  %422 = vmatprep.subr.mxu0 0.0
  %423 = vmatpush1.msra.mxu0 %v375
  %424 = vmatprep.subr.mxu0 0.0
  %425 = vmatpush1.msra.mxu0 %v374
  %426 = vmatprep.subr.mxu0 0.0
  %427 = vmatpush1.msra.mxu0 %v373
  %428 = vmatprep.subr.mxu0 0.0
  %429 = vmatpush2.msra.mxu0 0.0
  %430 = vmatprep.subr.mxu0 0.0
  %431 = vmatpush2.msra.mxu0 0.0
  %432 = vmatprep.subr.mxu0 0.0
  %433 = vmatpush2.msra.mxu0 0.0
  %434 = vmatprep.subr.mxu0 0.0
  %435 = vmatpush2.msra.mxu0 0.0
  %436 = vmatprep.subr.mxu0 0.0
  %437 = vmatpush2.msra.mxu0 0.0
  %438 = vmatprep.subr.mxu0 0.0
  %439 = vmatpush2.msra.mxu0 0.0
  %440 = vmatprep.subr.mxu0 0.0
  %441 = vmatpush2.msra.mxu0 0.0
  %442 = vmatprep.subr.mxu0 0.0
  %443 = vmatpush2.msra.mxu0 0.0
  %444 = vmatprep.subr.mxu0 0.0
  %445 = vmatpush2.msra.mxu0 0.0
  %446 = vmatprep.subr.mxu0 0.0
  %447 = vmatpush2.msra.mxu0 0.0
  %448 = vmatprep.subr.mxu0 0.0
  %449 = vmatpush2.msra.mxu0 0.0
  %450 = vmatprep.subr.mxu0 0.0
  %451 = vmatpush2.msra.mxu0 0.0
  %452 = vmatprep.subr.mxu0 0.0
  %453 = vmatpush2.msra.mxu0 0.0
  %454 = vmatprep.subr.mxu0 0.0
  %455 = vmatpush2.msra.mxu0 0.0
  %456 = vmatprep.subr.mxu0 0.0
  %457 = vmatpush2.msra.mxu0 0.0
  %458 = vmatprep.subr.mxu0 0.0
  %459 = vmatpush2.msra.mxu0 0.0
  %460 = vmatprep.mubr.f32.mxu0 0.0
  %461 = vmatmul.mubr.f32.gmra.mxu0 %v394
  %v462 = vpop.f32.mrf.mxu0
  %v463 = vadd.f32 %v392, %v462
  %v464 = vpop.f32.mrf.mxu0
  %465 = vdwg.mxu0
  %v466 = vxor.u32 %v463, 2147483648
  %v467 = vmul.f32 %v466, 1.442695
  %v468 = vpow.pop %v467
  %v469 = vadd.f32 %v468, 1.0
  %v470 = vrcp.pop %v469
  %v471 = vmul.f32 1.0, %v470
  %476 = vrot.lane.b32.xlu0 %v52, 96
  %v477 = vpop.permute.xlu0 %476
  %478 = vrot.lane.b32.xlu0 %v53, 96
  %v479 = vpop.permute.xlu0 %478
  %480 = vrot.lane.b32.xlu0 %v54, 96
  %v481 = vpop.permute.xlu0 %480
  %482 = vrot.lane.b32.xlu0 %v55, 96
  %v483 = vpop.permute.xlu0 %482
  %489 = vrot.lane.b32.xlu0 %v392, 32
  %v490 = vpop.permute.xlu0 %489
  %v492 = vsel %vm265, %v362, 0
  %494 = vmatprep.subr.mxu0 0.0
  %495 = vmatpush1.msra.mxu0 0.0
  %496 = vmatprep.subr.mxu0 0.0
  %497 = vmatpush1.msra.mxu0 0.0
  %498 = vmatprep.subr.mxu0 0.0
  %499 = vmatpush1.msra.mxu0 0.0
  %500 = vmatprep.subr.mxu0 0.0
  %501 = vmatpush1.msra.mxu0 0.0
  %502 = vmatprep.subr.mxu0 0.0
  %503 = vmatpush1.msra.mxu0 0.0
  %504 = vmatprep.subr.mxu0 0.0
  %505 = vmatpush1.msra.mxu0 0.0
  %506 = vmatprep.subr.mxu0 0.0
  %507 = vmatpush1.msra.mxu0 0.0
  %508 = vmatprep.subr.mxu0 0.0
  %509 = vmatpush1.msra.mxu0 0.0
  %510 = vmatprep.subr.mxu0 0.0
  %511 = vmatpush1.msra.mxu0 0.0
  %512 = vmatprep.subr.mxu0 0.0
  %513 = vmatpush1.msra.mxu0 0.0
  %514 = vmatprep.subr.mxu0 0.0
  %515 = vmatpush1.msra.mxu0 0.0
  %516 = vmatprep.subr.mxu0 0.0
  %517 = vmatpush1.msra.mxu0 0.0
  %518 = vmatprep.subr.mxu0 0.0
  %519 = vmatpush1.msra.mxu0 %v483
  %520 = vmatprep.subr.mxu0 0.0
  %521 = vmatpush1.msra.mxu0 %v481
  %522 = vmatprep.subr.mxu0 0.0
  %523 = vmatpush1.msra.mxu0 %v479
  %524 = vmatprep.subr.mxu0 0.0
  %525 = vmatpush1.msra.mxu0 %v477
  %526 = vmatprep.subr.mxu0 0.0
  %527 = vmatpush2.msra.mxu0 0.0
  %528 = vmatprep.subr.mxu0 0.0
  %529 = vmatpush2.msra.mxu0 0.0
  %530 = vmatprep.subr.mxu0 0.0
  %531 = vmatpush2.msra.mxu0 0.0
  %532 = vmatprep.subr.mxu0 0.0
  %533 = vmatpush2.msra.mxu0 0.0
  %534 = vmatprep.subr.mxu0 0.0
  %535 = vmatpush2.msra.mxu0 0.0
  %536 = vmatprep.subr.mxu0 0.0
  %537 = vmatpush2.msra.mxu0 0.0
  %538 = vmatprep.subr.mxu0 0.0
  %539 = vmatpush2.msra.mxu0 0.0
  %540 = vmatprep.subr.mxu0 0.0
  %541 = vmatpush2.msra.mxu0 0.0
  %542 = vmatprep.subr.mxu0 0.0
  %543 = vmatpush2.msra.mxu0 0.0
  %544 = vmatprep.subr.mxu0 0.0
  %545 = vmatpush2.msra.mxu0 0.0
  %546 = vmatprep.subr.mxu0 0.0
  %547 = vmatpush2.msra.mxu0 0.0
  %548 = vmatprep.subr.mxu0 0.0
  %549 = vmatpush2.msra.mxu0 0.0
  %550 = vmatprep.subr.mxu0 0.0
  %551 = vmatpush2.msra.mxu0 0.0
  %552 = vmatprep.subr.mxu0 0.0
  %553 = vmatpush2.msra.mxu0 0.0
  %554 = vmatprep.subr.mxu0 0.0
  %555 = vmatpush2.msra.mxu0 0.0
  %556 = vmatprep.subr.mxu0 0.0
  %557 = vmatpush2.msra.mxu0 0.0
  %558 = vmatprep.mubr.f32.mxu0 0.0
  %559 = vmatmul.mubr.f32.gmra.mxu0 %v492
  %v560 = vpop.f32.mrf.mxu0
  %v561 = vadd.f32 %v490, %v560
  %v562 = vpop.f32.mrf.mxu0
  %563 = vdwg.mxu0
  %v564 = vmul.f32 %v471, %v561
  %566 = vrot.lane.b32.xlu0 %v564, 64
  %v567 = vpop.permute.xlu0 %566
  %v569 = vadd.f32 %v463, %v567
  %v570 = vtanh.pop %v569
  %v571 = vsub.f32 1.0, %v471
  %573 = vrot.lane.b32.xlu0 %v570, 96
  %v574 = vpop.permute.xlu0 %573
  %v576 = vmul.f32 %v571, %v574
  %577 = vrot.lane.b32.xlu0 %v362, 32
  %v578 = vpop.permute.xlu0 %577
  %v580 = vmul.f32 %v471, %v578
  %v581 = vadd.f32 %v576, %v580
  %583 = vrot.lane.b32.xlu0 %v581, 96
  %v584 = vpop.permute.xlu0 %583
  %s586 = scalar_lea.vmem %s9, 8
  %587 = vst.msk [vmem:[%s586] sm:$0xff] %vm265, %v584
  %v588 = vlaneseq
  %v589 = vshrl.u32 %v588, 7
  %v590 = vsub.s32 4, %v589
  %v591 = vrot.slane %v56, %v590
  %v592 = vsel %vm265, %v584, 0
  %594 = vmatprep.subr.mxu0 0.0
  %595 = vmatpush1.msra.mxu0 0.0
  %596 = vmatprep.subr.mxu0 0.0
  %597 = vmatpush1.msra.mxu0 0.0
  %598 = vmatprep.subr.mxu0 0.0
  %599 = vmatpush1.msra.mxu0 0.0
  %600 = vmatprep.subr.mxu0 0.0
  %601 = vmatpush1.msra.mxu0 0.0
  %602 = vmatprep.subr.mxu0 0.0
  %603 = vmatpush1.msra.mxu0 0.0
  %604 = vmatprep.subr.mxu0 0.0
  %605 = vmatpush1.msra.mxu0 0.0
  %606 = vmatprep.subr.mxu0 0.0
  %607 = vmatpush1.msra.mxu0 0.0
  %608 = vmatprep.subr.mxu0 0.0
  %609 = vmatpush1.msra.mxu0 0.0
  %610 = vmatprep.subr.mxu0 0.0
  %611 = vmatpush1.msra.mxu0 0.0
  %612 = vmatprep.subr.mxu0 0.0
  %613 = vmatpush1.msra.mxu0 0.0
  %614 = vmatprep.subr.mxu0 0.0
  %615 = vmatpush1.msra.mxu0 0.0
  %616 = vmatprep.subr.mxu0 0.0
  %617 = vmatpush1.msra.mxu0 0.0
  %618 = vmatprep.subr.mxu0 0.0
  %619 = vmatpush1.msra.mxu0 %v64
  %620 = vmatprep.subr.mxu0 0.0
  %621 = vmatpush1.msra.mxu0 %v63
  %622 = vmatprep.subr.mxu0 0.0
  %623 = vmatpush1.msra.mxu0 %v62
  %624 = vmatprep.subr.mxu0 0.0
  %625 = vmatpush1.msra.mxu0 %v61
  %626 = vmatprep.subr.mxu0 0.0
  %627 = vmatpush2.msra.mxu0 0.0
  %628 = vmatprep.subr.mxu0 0.0
  %629 = vmatpush2.msra.mxu0 0.0
  %630 = vmatprep.subr.mxu0 0.0
  %631 = vmatpush2.msra.mxu0 0.0
  %632 = vmatprep.subr.mxu0 0.0
  %633 = vmatpush2.msra.mxu0 0.0
  %634 = vmatprep.subr.mxu0 0.0
  %635 = vmatpush2.msra.mxu0 0.0
  %636 = vmatprep.subr.mxu0 0.0
  %637 = vmatpush2.msra.mxu0 0.0
  %638 = vmatprep.subr.mxu0 0.0
  %639 = vmatpush2.msra.mxu0 0.0
  %640 = vmatprep.subr.mxu0 0.0
  %641 = vmatpush2.msra.mxu0 0.0
  %642 = vmatprep.subr.mxu0 0.0
  %643 = vmatpush2.msra.mxu0 0.0
  %644 = vmatprep.subr.mxu0 0.0
  %645 = vmatpush2.msra.mxu0 0.0
  %646 = vmatprep.subr.mxu0 0.0
  %647 = vmatpush2.msra.mxu0 0.0
  %648 = vmatprep.subr.mxu0 0.0
  %649 = vmatpush2.msra.mxu0 0.0
  %650 = vmatprep.subr.mxu0 0.0
  %651 = vmatpush2.msra.mxu0 0.0
  %652 = vmatprep.subr.mxu0 0.0
  %653 = vmatpush2.msra.mxu0 0.0
  %654 = vmatprep.subr.mxu0 0.0
  %655 = vmatpush2.msra.mxu0 0.0
  %656 = vmatprep.subr.mxu0 0.0
  %657 = vmatpush2.msra.mxu0 0.0
  %658 = vmatprep.mubr.f32.mxu0 0.0
  %659 = vmatmul.mubr.f32.gmra.mxu0 %v592
  %v660 = vpop.f32.mrf.mxu0
  %v661 = vadd.f32 %v591, %v660
  %v662 = vpop.f32.mrf.mxu0
  %663 = vdwg.mxu0
  %v664 = vsel %vm74, %v661, -inf
  %665 = vmax.xlane.f32.xlu0 %v664
  %v666 = vpop.xlane.xlu0 %665
  %v667 = vsub.f32 %v661, %v666
  %v668 = vmul.f32 %v667, 1.442695
  %v669 = vpow.pop %v668
  %v670 = vsel %vm74, %v669, 0.0
  %671 = vadd.xlane.f32.xlu0 %v670
  %v672 = vpop.xlane.xlu0 %671
  %681 = vrot.lane.b32.xlu0 %v40, 112
  %v682 = vpop.permute.xlu0 %681
  %683 = vrot.lane.b32.xlu0 %v41, 112
  %v684 = vpop.permute.xlu0 %683
  %685 = vrot.lane.b32.xlu0 %v42, 112
  %v686 = vpop.permute.xlu0 %685
  %687 = vrot.lane.b32.xlu0 %v43, 112
  %v688 = vpop.permute.xlu0 %687
  %689 = vrot.lane.b32.xlu0 %v44, 112
  %v690 = vpop.permute.xlu0 %689
  %691 = vrot.lane.b32.xlu0 %v45, 112
  %v692 = vpop.permute.xlu0 %691
  %693 = vrot.lane.b32.xlu0 %v46, 112
  %v694 = vpop.permute.xlu0 %693
  %695 = vrot.lane.b32.xlu0 %v47, 112
  %v696 = vpop.permute.xlu0 %695
  %v706 = vsel %vm74, %v669, 0
  %708 = vmatprep.subr.mxu0 0.0
  %709 = vmatpush1.msra.mxu0 0.0
  %710 = vmatprep.subr.mxu0 0.0
  %711 = vmatpush1.msra.mxu0 0.0
  %712 = vmatprep.subr.mxu0 0.0
  %713 = vmatpush1.msra.mxu0 0.0
  %714 = vmatprep.subr.mxu0 0.0
  %715 = vmatpush1.msra.mxu0 0.0
  %716 = vmatprep.subr.mxu0 0.0
  %717 = vmatpush1.msra.mxu0 0.0
  %718 = vmatprep.subr.mxu0 0.0
  %719 = vmatpush1.msra.mxu0 0.0
  %720 = vmatprep.subr.mxu0 0.0
  %721 = vmatpush1.msra.mxu0 0.0
  %722 = vmatprep.subr.mxu0 0.0
  %723 = vmatpush1.msra.mxu0 0.0
  %724 = vmatprep.subr.mxu0 0.0
  %725 = vmatpush1.msra.mxu0 %v696
  %726 = vmatprep.subr.mxu0 0.0
  %727 = vmatpush1.msra.mxu0 %v694
  %728 = vmatprep.subr.mxu0 0.0
  %729 = vmatpush1.msra.mxu0 %v692
  %730 = vmatprep.subr.mxu0 0.0
  %731 = vmatpush1.msra.mxu0 %v690
  %732 = vmatprep.subr.mxu0 0.0
  %733 = vmatpush1.msra.mxu0 %v688
  %734 = vmatprep.subr.mxu0 0.0
  %735 = vmatpush1.msra.mxu0 %v686
  %736 = vmatprep.subr.mxu0 0.0
  %737 = vmatpush1.msra.mxu0 %v684
  %738 = vmatprep.subr.mxu0 0.0
  %739 = vmatpush1.msra.mxu0 %v682
  %740 = vmatprep.subr.mxu0 0.0
  %741 = vmatpush2.msra.mxu0 0.0
  %742 = vmatprep.subr.mxu0 0.0
  %743 = vmatpush2.msra.mxu0 0.0
  %744 = vmatprep.subr.mxu0 0.0
  %745 = vmatpush2.msra.mxu0 0.0
  %746 = vmatprep.subr.mxu0 0.0
  %747 = vmatpush2.msra.mxu0 0.0
  %748 = vmatprep.subr.mxu0 0.0
  %749 = vmatpush2.msra.mxu0 0.0
  %750 = vmatprep.subr.mxu0 0.0
  %751 = vmatpush2.msra.mxu0 0.0
  %752 = vmatprep.subr.mxu0 0.0
  %753 = vmatpush2.msra.mxu0 0.0
  %754 = vmatprep.subr.mxu0 0.0
  %755 = vmatpush2.msra.mxu0 0.0
  %756 = vmatprep.subr.mxu0 0.0
  %757 = vmatpush2.msra.mxu0 0.0
  %758 = vmatprep.subr.mxu0 0.0
  %759 = vmatpush2.msra.mxu0 0.0
  %760 = vmatprep.subr.mxu0 0.0
  %761 = vmatpush2.msra.mxu0 0.0
  %762 = vmatprep.subr.mxu0 0.0
  %763 = vmatpush2.msra.mxu0 0.0
  %764 = vmatprep.subr.mxu0 0.0
  %765 = vmatpush2.msra.mxu0 0.0
  %766 = vmatprep.subr.mxu0 0.0
  %767 = vmatpush2.msra.mxu0 0.0
  %768 = vmatprep.subr.mxu0 0.0
  %769 = vmatpush2.msra.mxu0 0.0
  %770 = vmatprep.subr.mxu0 0.0
  %771 = vmatpush2.msra.mxu0 0.0
  %772 = vmatprep.mubr.f32.mxu0 0.0
  %773 = vmatmul.mubr.f32.gmra.mxu0 %v706
  %v774 = vpop.f32.mrf.mxu0
  %v775 = vadd.f32 0.0, %v774
  %v776 = vpop.f32.mrf.mxu0
  %777 = vdwg.mxu0
  %v778 = vrcp.pop %v672
  %v779 = vmul.f32 %v775, %v778
  %780 = vrot.lane.b32.xlu0 %v581, 104
  %v781 = vpop.permute.xlu0 %780
  %vm783 = vcmask 64512
  %v784 = vsel %vm783, %v779, %v781
  %v785 = vld [vmem:[%s7] sm:$0xff]
  %v786 = vld [vmem:[%s2 + $0x50] sm:$0xf]
  %v787 = vld [vmem:[%s2 + $0x54] sm:$0xf]
  %v788 = vld [vmem:[%s2 + $0x58] sm:$0xf]
  %v789 = vld [vmem:[%s2 + $0x5c] sm:$0xf]
  %v790 = vld [vmem:[%s2 + $0x60] sm:$0xf]
  %v791 = vld [vmem:[%s2 + $0x64] sm:$0xf]
  %v792 = vld [vmem:[%s2 + $0x68] sm:$0xf]
  %v793 = vld [vmem:[%s2 + $0x6c] sm:$0xf]
  %v794 = vld [vmem:[%s2 + $0x70] sm:$0xf]
  %v795 = vld [vmem:[%s2 + $0x74] sm:$0xf]
  %v796 = vunpack.c.l.bf16 %v786
  %v797 = vunpack.c.l.bf16 %v787
  %v798 = vunpack.c.l.bf16 %v788
  %v799 = vunpack.c.l.bf16 %v789
  %v800 = vunpack.c.l.bf16 %v790
  %v801 = vunpack.c.l.bf16 %v791
  %v802 = vunpack.c.l.bf16 %v792
  %v803 = vunpack.c.l.bf16 %v793
  %v804 = vunpack.c.l.bf16 %v794
  %v805 = vunpack.c.l.bf16 %v795
  %807 = vrot.lane.b32.xlu0 %v785, 48
  %v808 = vpop.permute.xlu0 %807
  %vm810 = vcmask 326656
  %v811 = vsel %vm810, %v784, 0.0
  %v812 = vsel %vm175, %v811, %v808
  %v813 = vlaneseq
  %v814 = vshrl.u32 %v813, 7
  %v815 = vsub.s32 2, %v814
  %v816 = vrot.slane %v56, %v815
  %v818 = vsel %vm181, %v812, 0
  %820 = vmatprep.subr.mxu0 0.0
  %821 = vmatpush1.msra.mxu0 0.0
  %822 = vmatprep.subr.mxu0 0.0
  %823 = vmatpush1.msra.mxu0 0.0
  %824 = vmatprep.subr.mxu0 0.0
  %825 = vmatpush1.msra.mxu0 0.0
  %826 = vmatprep.subr.mxu0 0.0
  %827 = vmatpush1.msra.mxu0 0.0
  %828 = vmatprep.subr.mxu0 0.0
  %829 = vmatpush1.msra.mxu0 0.0
  %830 = vmatprep.subr.mxu0 0.0
  %831 = vmatpush1.msra.mxu0 0.0
  %832 = vmatprep.subr.mxu0 0.0
  %833 = vmatpush1.msra.mxu0 %v805
  %834 = vmatprep.subr.mxu0 0.0
  %835 = vmatpush1.msra.mxu0 %v804
  %836 = vmatprep.subr.mxu0 0.0
  %837 = vmatpush1.msra.mxu0 %v803
  %838 = vmatprep.subr.mxu0 0.0
  %839 = vmatpush1.msra.mxu0 %v802
  %840 = vmatprep.subr.mxu0 0.0
  %841 = vmatpush1.msra.mxu0 %v801
  %842 = vmatprep.subr.mxu0 0.0
  %843 = vmatpush1.msra.mxu0 %v800
  %844 = vmatprep.subr.mxu0 0.0
  %845 = vmatpush1.msra.mxu0 %v799
  %846 = vmatprep.subr.mxu0 0.0
  %847 = vmatpush1.msra.mxu0 %v798
  %848 = vmatprep.subr.mxu0 0.0
  %849 = vmatpush1.msra.mxu0 %v797
  %850 = vmatprep.subr.mxu0 0.0
  %851 = vmatpush1.msra.mxu0 %v796
  %852 = vmatprep.subr.mxu0 0.0
  %853 = vmatpush2.msra.mxu0 0.0
  %854 = vmatprep.subr.mxu0 0.0
  %855 = vmatpush2.msra.mxu0 0.0
  %856 = vmatprep.subr.mxu0 0.0
  %857 = vmatpush2.msra.mxu0 0.0
  %858 = vmatprep.subr.mxu0 0.0
  %859 = vmatpush2.msra.mxu0 0.0
  %860 = vmatprep.subr.mxu0 0.0
  %861 = vmatpush2.msra.mxu0 0.0
  %862 = vmatprep.subr.mxu0 0.0
  %863 = vmatpush2.msra.mxu0 0.0
  %864 = vmatprep.subr.mxu0 0.0
  %865 = vmatpush2.msra.mxu0 0.0
  %866 = vmatprep.subr.mxu0 0.0
  %867 = vmatpush2.msra.mxu0 0.0
  %868 = vmatprep.subr.mxu0 0.0
  %869 = vmatpush2.msra.mxu0 0.0
  %870 = vmatprep.subr.mxu0 0.0
  %871 = vmatpush2.msra.mxu0 0.0
  %872 = vmatprep.subr.mxu0 0.0
  %873 = vmatpush2.msra.mxu0 0.0
  %874 = vmatprep.subr.mxu0 0.0
  %875 = vmatpush2.msra.mxu0 0.0
  %876 = vmatprep.subr.mxu0 0.0
  %877 = vmatpush2.msra.mxu0 0.0
  %878 = vmatprep.subr.mxu0 0.0
  %879 = vmatpush2.msra.mxu0 0.0
  %880 = vmatprep.subr.mxu0 0.0
  %881 = vmatpush2.msra.mxu0 0.0
  %882 = vmatprep.subr.mxu0 0.0
  %883 = vmatpush2.msra.mxu0 0.0
  %884 = vmatprep.mubr.f32.mxu0 0.0
  %885 = vmatmul.mubr.f32.gmra.mxu0 %v818
  %v886 = vpop.f32.mrf.mxu0
  %v887 = vadd.f32 %v816, %v886
  %v888 = vpop.f32.mrf.mxu0
  %889 = vdwg.mxu0
  %v890 = vxor.u32 %v887, 2147483648
  %v891 = vmul.f32 %v890, 1.442695
  %v892 = vpow.pop %v891
  %v893 = vadd.f32 %v892, 1.0
  %v894 = vrcp.pop %v893
  %v895 = vmul.f32 1.0, %v894
  %896 = vrot.lane.b32.xlu0 %v52, 64
  %v897 = vpop.permute.xlu0 %896
  %898 = vrot.lane.b32.xlu0 %v53, 64
  %v899 = vpop.permute.xlu0 %898
  %900 = vrot.lane.b32.xlu0 %v54, 64
  %v901 = vpop.permute.xlu0 %900
  %902 = vrot.lane.b32.xlu0 %v55, 64
  %v903 = vpop.permute.xlu0 %902
  %909 = vrot.lane.b32.xlu0 %v816, 32
  %v910 = vpop.permute.xlu0 %909
  %v912 = vsel %vm265, %v785, 0
  %914 = vmatprep.subr.mxu0 0.0
  %915 = vmatpush1.msra.mxu0 0.0
  %916 = vmatprep.subr.mxu0 0.0
  %917 = vmatpush1.msra.mxu0 0.0
  %918 = vmatprep.subr.mxu0 0.0
  %919 = vmatpush1.msra.mxu0 0.0
  %920 = vmatprep.subr.mxu0 0.0
  %921 = vmatpush1.msra.mxu0 0.0
  %922 = vmatprep.subr.mxu0 0.0
  %923 = vmatpush1.msra.mxu0 0.0
  %924 = vmatprep.subr.mxu0 0.0
  %925 = vmatpush1.msra.mxu0 0.0
  %926 = vmatprep.subr.mxu0 0.0
  %927 = vmatpush1.msra.mxu0 0.0
  %928 = vmatprep.subr.mxu0 0.0
  %929 = vmatpush1.msra.mxu0 0.0
  %930 = vmatprep.subr.mxu0 0.0
  %931 = vmatpush1.msra.mxu0 0.0
  %932 = vmatprep.subr.mxu0 0.0
  %933 = vmatpush1.msra.mxu0 0.0
  %934 = vmatprep.subr.mxu0 0.0
  %935 = vmatpush1.msra.mxu0 0.0
  %936 = vmatprep.subr.mxu0 0.0
  %937 = vmatpush1.msra.mxu0 0.0
  %938 = vmatprep.subr.mxu0 0.0
  %939 = vmatpush1.msra.mxu0 %v903
  %940 = vmatprep.subr.mxu0 0.0
  %941 = vmatpush1.msra.mxu0 %v901
  %942 = vmatprep.subr.mxu0 0.0
  %943 = vmatpush1.msra.mxu0 %v899
  %944 = vmatprep.subr.mxu0 0.0
  %945 = vmatpush1.msra.mxu0 %v897
  %946 = vmatprep.subr.mxu0 0.0
  %947 = vmatpush2.msra.mxu0 0.0
  %948 = vmatprep.subr.mxu0 0.0
  %949 = vmatpush2.msra.mxu0 0.0
  %950 = vmatprep.subr.mxu0 0.0
  %951 = vmatpush2.msra.mxu0 0.0
  %952 = vmatprep.subr.mxu0 0.0
  %953 = vmatpush2.msra.mxu0 0.0
  %954 = vmatprep.subr.mxu0 0.0
  %955 = vmatpush2.msra.mxu0 0.0
  %956 = vmatprep.subr.mxu0 0.0
  %957 = vmatpush2.msra.mxu0 0.0
  %958 = vmatprep.subr.mxu0 0.0
  %959 = vmatpush2.msra.mxu0 0.0
  %960 = vmatprep.subr.mxu0 0.0
  %961 = vmatpush2.msra.mxu0 0.0
  %962 = vmatprep.subr.mxu0 0.0
  %963 = vmatpush2.msra.mxu0 0.0
  %964 = vmatprep.subr.mxu0 0.0
  %965 = vmatpush2.msra.mxu0 0.0
  %966 = vmatprep.subr.mxu0 0.0
  %967 = vmatpush2.msra.mxu0 0.0
  %968 = vmatprep.subr.mxu0 0.0
  %969 = vmatpush2.msra.mxu0 0.0
  %970 = vmatprep.subr.mxu0 0.0
  %971 = vmatpush2.msra.mxu0 0.0
  %972 = vmatprep.subr.mxu0 0.0
  %973 = vmatpush2.msra.mxu0 0.0
  %974 = vmatprep.subr.mxu0 0.0
  %975 = vmatpush2.msra.mxu0 0.0
  %976 = vmatprep.subr.mxu0 0.0
  %977 = vmatpush2.msra.mxu0 0.0
  %978 = vmatprep.mubr.f32.mxu0 0.0
  %979 = vmatmul.mubr.f32.gmra.mxu0 %v912
  %v980 = vpop.f32.mrf.mxu0
  %v981 = vadd.f32 %v910, %v980
  %v982 = vpop.f32.mrf.mxu0
  %983 = vdwg.mxu0
  %v984 = vmul.f32 %v895, %v981
  %986 = vrot.lane.b32.xlu0 %v984, 64
  %v987 = vpop.permute.xlu0 %986
  %v989 = vadd.f32 %v887, %v987
  %v990 = vtanh.pop %v989
  %v991 = vsub.f32 1.0, %v895
  %993 = vrot.lane.b32.xlu0 %v990, 96
  %v994 = vpop.permute.xlu0 %993
  %v996 = vmul.f32 %v991, %v994
  %997 = vrot.lane.b32.xlu0 %v785, 32
  %v998 = vpop.permute.xlu0 %997
  %v1000 = vmul.f32 %v895, %v998
  %v1001 = vadd.f32 %v996, %v1000
  %1003 = vrot.lane.b32.xlu0 %v1001, 96
  %v1004 = vpop.permute.xlu0 %1003
  %1006 = vst.msk [vmem:[%s10] sm:$0xff] %vm265, %v1004
  %s1007 = scalar_lea.vmem %s7, 8
  %v1008 = vld [vmem:[%s1007] sm:$0xff]
  %v1009 = vld [vmem:[%s2 + $0x78] sm:$0xf]
  %v1010 = vld [vmem:[%s2 + $0x7c] sm:$0xf]
  %v1011 = vld [vmem:[%s2 + $0x80] sm:$0xf]
  %v1012 = vld [vmem:[%s2 + $0x84] sm:$0xf]
  %v1013 = vld [vmem:[%s2 + $0x88] sm:$0xf]
  %v1014 = vld [vmem:[%s2 + $0x8c] sm:$0xf]
  %v1015 = vld [vmem:[%s2 + $0x90] sm:$0xf]
  %v1016 = vld [vmem:[%s2 + $0x94] sm:$0xf]
  %v1017 = vld [vmem:[%s2 + $0x98] sm:$0xf]
  %v1018 = vld [vmem:[%s2 + $0x9c] sm:$0xf]
  %v1019 = vunpack.c.l.bf16 %v1009
  %v1020 = vunpack.c.l.bf16 %v1010
  %v1021 = vunpack.c.l.bf16 %v1011
  %v1022 = vunpack.c.l.bf16 %v1012
  %v1023 = vunpack.c.l.bf16 %v1013
  %v1024 = vunpack.c.l.bf16 %v1014
  %v1025 = vunpack.c.l.bf16 %v1015
  %v1026 = vunpack.c.l.bf16 %v1016
  %v1027 = vunpack.c.l.bf16 %v1017
  %v1028 = vunpack.c.l.bf16 %v1018
  %1030 = vrot.lane.b32.xlu0 %v1008, 48
  %v1031 = vpop.permute.xlu0 %1030
  %v1033 = vsel %vm265, %v1004, 0.0
  %v1034 = vsel %vm175, %v1033, %v1031
  %v1035 = vlaneseq
  %v1036 = vshrl.u32 %v1035, 7
  %v1037 = vsub.s32 3, %v1036
  %v1038 = vrot.slane %v56, %v1037
  %v1040 = vsel %vm181, %v1034, 0
  %1042 = vmatprep.subr.mxu0 0.0
  %1043 = vmatpush1.msra.mxu0 0.0
  %1044 = vmatprep.subr.mxu0 0.0
  %1045 = vmatpush1.msra.mxu0 0.0
  %1046 = vmatprep.subr.mxu0 0.0
  %1047 = vmatpush1.msra.mxu0 0.0
  %1048 = vmatprep.subr.mxu0 0.0
  %1049 = vmatpush1.msra.mxu0 0.0
  %1050 = vmatprep.subr.mxu0 0.0
  %1051 = vmatpush1.msra.mxu0 0.0
  %1052 = vmatprep.subr.mxu0 0.0
  %1053 = vmatpush1.msra.mxu0 0.0
  %1054 = vmatprep.subr.mxu0 0.0
  %1055 = vmatpush1.msra.mxu0 %v1028
  %1056 = vmatprep.subr.mxu0 0.0
  %1057 = vmatpush1.msra.mxu0 %v1027
  %1058 = vmatprep.subr.mxu0 0.0
  %1059 = vmatpush1.msra.mxu0 %v1026
  %1060 = vmatprep.subr.mxu0 0.0
  %1061 = vmatpush1.msra.mxu0 %v1025
  %1062 = vmatprep.subr.mxu0 0.0
  %1063 = vmatpush1.msra.mxu0 %v1024
  %1064 = vmatprep.subr.mxu0 0.0
  %1065 = vmatpush1.msra.mxu0 %v1023
  %1066 = vmatprep.subr.mxu0 0.0
  %1067 = vmatpush1.msra.mxu0 %v1022
  %1068 = vmatprep.subr.mxu0 0.0
  %1069 = vmatpush1.msra.mxu0 %v1021
  %1070 = vmatprep.subr.mxu0 0.0
  %1071 = vmatpush1.msra.mxu0 %v1020
  %1072 = vmatprep.subr.mxu0 0.0
  %1073 = vmatpush1.msra.mxu0 %v1019
  %1074 = vmatprep.subr.mxu0 0.0
  %1075 = vmatpush2.msra.mxu0 0.0
  %1076 = vmatprep.subr.mxu0 0.0
  %1077 = vmatpush2.msra.mxu0 0.0
  %1078 = vmatprep.subr.mxu0 0.0
  %1079 = vmatpush2.msra.mxu0 0.0
  %1080 = vmatprep.subr.mxu0 0.0
  %1081 = vmatpush2.msra.mxu0 0.0
  %1082 = vmatprep.subr.mxu0 0.0
  %1083 = vmatpush2.msra.mxu0 0.0
  %1084 = vmatprep.subr.mxu0 0.0
  %1085 = vmatpush2.msra.mxu0 0.0
  %1086 = vmatprep.subr.mxu0 0.0
  %1087 = vmatpush2.msra.mxu0 0.0
  %1088 = vmatprep.subr.mxu0 0.0
  %1089 = vmatpush2.msra.mxu0 0.0
  %1090 = vmatprep.subr.mxu0 0.0
  %1091 = vmatpush2.msra.mxu0 0.0
  %1092 = vmatprep.subr.mxu0 0.0
  %1093 = vmatpush2.msra.mxu0 0.0
  %1094 = vmatprep.subr.mxu0 0.0
  %1095 = vmatpush2.msra.mxu0 0.0
  %1096 = vmatprep.subr.mxu0 0.0
  %1097 = vmatpush2.msra.mxu0 0.0
  %1098 = vmatprep.subr.mxu0 0.0
  %1099 = vmatpush2.msra.mxu0 0.0
  %1100 = vmatprep.subr.mxu0 0.0
  %1101 = vmatpush2.msra.mxu0 0.0
  %1102 = vmatprep.subr.mxu0 0.0
  %1103 = vmatpush2.msra.mxu0 0.0
  %1104 = vmatprep.subr.mxu0 0.0
  %1105 = vmatpush2.msra.mxu0 0.0
  %1106 = vmatprep.mubr.f32.mxu0 0.0
  %1107 = vmatmul.mubr.f32.gmra.mxu0 %v1040
  %v1108 = vpop.f32.mrf.mxu0
  %v1109 = vadd.f32 %v1038, %v1108
  %v1110 = vpop.f32.mrf.mxu0
  %1111 = vdwg.mxu0
  %v1112 = vxor.u32 %v1109, 2147483648
  %v1113 = vmul.f32 %v1112, 1.442695
  %v1114 = vpow.pop %v1113
  %v1115 = vadd.f32 %v1114, 1.0
  %v1116 = vrcp.pop %v1115
  %v1117 = vmul.f32 1.0, %v1116
  %1118 = vrot.lane.b32.xlu0 %v52, 32
  %v1119 = vpop.permute.xlu0 %1118
  %1120 = vrot.lane.b32.xlu0 %v53, 32
  %v1121 = vpop.permute.xlu0 %1120
  %1122 = vrot.lane.b32.xlu0 %v54, 32
  %v1123 = vpop.permute.xlu0 %1122
  %1124 = vrot.lane.b32.xlu0 %v55, 32
  %v1125 = vpop.permute.xlu0 %1124
  %1131 = vrot.lane.b32.xlu0 %v1038, 32
  %v1132 = vpop.permute.xlu0 %1131
  %v1134 = vsel %vm265, %v1008, 0
  %1136 = vmatprep.subr.mxu0 0.0
  %1137 = vmatpush1.msra.mxu0 0.0
  %1138 = vmatprep.subr.mxu0 0.0
  %1139 = vmatpush1.msra.mxu0 0.0
  %1140 = vmatprep.subr.mxu0 0.0
  %1141 = vmatpush1.msra.mxu0 0.0
  %1142 = vmatprep.subr.mxu0 0.0
  %1143 = vmatpush1.msra.mxu0 0.0
  %1144 = vmatprep.subr.mxu0 0.0
  %1145 = vmatpush1.msra.mxu0 0.0
  %1146 = vmatprep.subr.mxu0 0.0
  %1147 = vmatpush1.msra.mxu0 0.0
  %1148 = vmatprep.subr.mxu0 0.0
  %1149 = vmatpush1.msra.mxu0 0.0
  %1150 = vmatprep.subr.mxu0 0.0
  %1151 = vmatpush1.msra.mxu0 0.0
  %1152 = vmatprep.subr.mxu0 0.0
  %1153 = vmatpush1.msra.mxu0 0.0
  %1154 = vmatprep.subr.mxu0 0.0
  %1155 = vmatpush1.msra.mxu0 0.0
  %1156 = vmatprep.subr.mxu0 0.0
  %1157 = vmatpush1.msra.mxu0 0.0
  %1158 = vmatprep.subr.mxu0 0.0
  %1159 = vmatpush1.msra.mxu0 0.0
  %1160 = vmatprep.subr.mxu0 0.0
  %1161 = vmatpush1.msra.mxu0 %v1125
  %1162 = vmatprep.subr.mxu0 0.0
  %1163 = vmatpush1.msra.mxu0 %v1123
  %1164 = vmatprep.subr.mxu0 0.0
  %1165 = vmatpush1.msra.mxu0 %v1121
  %1166 = vmatprep.subr.mxu0 0.0
  %1167 = vmatpush1.msra.mxu0 %v1119
  %1168 = vmatprep.subr.mxu0 0.0
  %1169 = vmatpush2.msra.mxu0 0.0
  %1170 = vmatprep.subr.mxu0 0.0
  %1171 = vmatpush2.msra.mxu0 0.0
  %1172 = vmatprep.subr.mxu0 0.0
  %1173 = vmatpush2.msra.mxu0 0.0
  %1174 = vmatprep.subr.mxu0 0.0
  %1175 = vmatpush2.msra.mxu0 0.0
  %1176 = vmatprep.subr.mxu0 0.0
  %1177 = vmatpush2.msra.mxu0 0.0
  %1178 = vmatprep.subr.mxu0 0.0
  %1179 = vmatpush2.msra.mxu0 0.0
  %1180 = vmatprep.subr.mxu0 0.0
  %1181 = vmatpush2.msra.mxu0 0.0
  %1182 = vmatprep.subr.mxu0 0.0
  %1183 = vmatpush2.msra.mxu0 0.0
  %1184 = vmatprep.subr.mxu0 0.0
  %1185 = vmatpush2.msra.mxu0 0.0
  %1186 = vmatprep.subr.mxu0 0.0
  %1187 = vmatpush2.msra.mxu0 0.0
  %1188 = vmatprep.subr.mxu0 0.0
  %1189 = vmatpush2.msra.mxu0 0.0
  %1190 = vmatprep.subr.mxu0 0.0
  %1191 = vmatpush2.msra.mxu0 0.0
  %1192 = vmatprep.subr.mxu0 0.0
  %1193 = vmatpush2.msra.mxu0 0.0
  %1194 = vmatprep.subr.mxu0 0.0
  %1195 = vmatpush2.msra.mxu0 0.0
  %1196 = vmatprep.subr.mxu0 0.0
  %1197 = vmatpush2.msra.mxu0 0.0
  %1198 = vmatprep.subr.mxu0 0.0
  %1199 = vmatpush2.msra.mxu0 0.0
  %1200 = vmatprep.mubr.f32.mxu0 0.0
  %1201 = vmatmul.mubr.f32.gmra.mxu0 %v1134
  %v1202 = vpop.f32.mrf.mxu0
  %v1203 = vadd.f32 %v1132, %v1202
  %v1204 = vpop.f32.mrf.mxu0
  %1205 = vdwg.mxu0
  %v1206 = vmul.f32 %v1117, %v1203
  %1208 = vrot.lane.b32.xlu0 %v1206, 64
  %v1209 = vpop.permute.xlu0 %1208
  %v1211 = vadd.f32 %v1109, %v1209
  %v1212 = vtanh.pop %v1211
  %v1213 = vsub.f32 1.0, %v1117
  %1215 = vrot.lane.b32.xlu0 %v1212, 96
  %v1216 = vpop.permute.xlu0 %1215
  %v1218 = vmul.f32 %v1213, %v1216
  %1219 = vrot.lane.b32.xlu0 %v1008, 32
  %v1220 = vpop.permute.xlu0 %1219
  %v1222 = vmul.f32 %v1117, %v1220
  %v1223 = vadd.f32 %v1218, %v1222
  %1225 = vrot.lane.b32.xlu0 %v1223, 96
  %v1226 = vpop.permute.xlu0 %1225
  %s1228 = scalar_lea.vmem %s10, 8
  %1229 = vst.msk [vmem:[%s1228] sm:$0xff] %vm265, %v1226
  %1234 = vrot.lane.b32.xlu0 %v61, 64
  %v1235 = vpop.permute.xlu0 %1234
  %1236 = vrot.lane.b32.xlu0 %v62, 64
  %v1237 = vpop.permute.xlu0 %1236
  %1238 = vrot.lane.b32.xlu0 %v63, 64
  %v1239 = vpop.permute.xlu0 %1238
  %1240 = vrot.lane.b32.xlu0 %v64, 64
  %v1241 = vpop.permute.xlu0 %1240
  %1247 = vrot.lane.b32.xlu0 %v591, 64
  %v1248 = vpop.permute.xlu0 %1247
  %v1250 = vsel %vm265, %v1226, 0
  %1252 = vmatprep.subr.mxu0 0.0
  %1253 = vmatpush1.msra.mxu0 0.0
  %1254 = vmatprep.subr.mxu0 0.0
  %1255 = vmatpush1.msra.mxu0 0.0
  %1256 = vmatprep.subr.mxu0 0.0
  %1257 = vmatpush1.msra.mxu0 0.0
  %1258 = vmatprep.subr.mxu0 0.0
  %1259 = vmatpush1.msra.mxu0 0.0
  %1260 = vmatprep.subr.mxu0 0.0
  %1261 = vmatpush1.msra.mxu0 0.0
  %1262 = vmatprep.subr.mxu0 0.0
  %1263 = vmatpush1.msra.mxu0 0.0
  %1264 = vmatprep.subr.mxu0 0.0
  %1265 = vmatpush1.msra.mxu0 0.0
  %1266 = vmatprep.subr.mxu0 0.0
  %1267 = vmatpush1.msra.mxu0 0.0
  %1268 = vmatprep.subr.mxu0 0.0
  %1269 = vmatpush1.msra.mxu0 0.0
  %1270 = vmatprep.subr.mxu0 0.0
  %1271 = vmatpush1.msra.mxu0 0.0
  %1272 = vmatprep.subr.mxu0 0.0
  %1273 = vmatpush1.msra.mxu0 0.0
  %1274 = vmatprep.subr.mxu0 0.0
  %1275 = vmatpush1.msra.mxu0 0.0
  %1276 = vmatprep.subr.mxu0 0.0
  %1277 = vmatpush1.msra.mxu0 %v1241
  %1278 = vmatprep.subr.mxu0 0.0
  %1279 = vmatpush1.msra.mxu0 %v1239
  %1280 = vmatprep.subr.mxu0 0.0
  %1281 = vmatpush1.msra.mxu0 %v1237
  %1282 = vmatprep.subr.mxu0 0.0
  %1283 = vmatpush1.msra.mxu0 %v1235
  %1284 = vmatprep.subr.mxu0 0.0
  %1285 = vmatpush2.msra.mxu0 0.0
  %1286 = vmatprep.subr.mxu0 0.0
  %1287 = vmatpush2.msra.mxu0 0.0
  %1288 = vmatprep.subr.mxu0 0.0
  %1289 = vmatpush2.msra.mxu0 0.0
  %1290 = vmatprep.subr.mxu0 0.0
  %1291 = vmatpush2.msra.mxu0 0.0
  %1292 = vmatprep.subr.mxu0 0.0
  %1293 = vmatpush2.msra.mxu0 0.0
  %1294 = vmatprep.subr.mxu0 0.0
  %1295 = vmatpush2.msra.mxu0 0.0
  %1296 = vmatprep.subr.mxu0 0.0
  %1297 = vmatpush2.msra.mxu0 0.0
  %1298 = vmatprep.subr.mxu0 0.0
  %1299 = vmatpush2.msra.mxu0 0.0
  %1300 = vmatprep.subr.mxu0 0.0
  %1301 = vmatpush2.msra.mxu0 0.0
  %1302 = vmatprep.subr.mxu0 0.0
  %1303 = vmatpush2.msra.mxu0 0.0
  %1304 = vmatprep.subr.mxu0 0.0
  %1305 = vmatpush2.msra.mxu0 0.0
  %1306 = vmatprep.subr.mxu0 0.0
  %1307 = vmatpush2.msra.mxu0 0.0
  %1308 = vmatprep.subr.mxu0 0.0
  %1309 = vmatpush2.msra.mxu0 0.0
  %1310 = vmatprep.subr.mxu0 0.0
  %1311 = vmatpush2.msra.mxu0 0.0
  %1312 = vmatprep.subr.mxu0 0.0
  %1313 = vmatpush2.msra.mxu0 0.0
  %1314 = vmatprep.subr.mxu0 0.0
  %1315 = vmatpush2.msra.mxu0 0.0
  %1316 = vmatprep.mubr.f32.mxu0 0.0
  %1317 = vmatmul.mubr.f32.gmra.mxu0 %v1250
  %v1318 = vpop.f32.mrf.mxu0
  %v1319 = vadd.f32 %v1248, %v1318
  %v1320 = vpop.f32.mrf.mxu0
  %1321 = vdwg.mxu0
  %1323 = vrot.lane.b32.xlu0 %v1319, 64
  %v1324 = vpop.permute.xlu0 %1323
  %v1326 = vsel %vm74, %v661, %v1324
  %1327 = vst [vmem:[%s8] sm:$0xff] %v1326
  // Predicated region
  $region34: #{decoder_forward.1} parent=0 // pred_check
    _
  $region35: #{decoder_forward.1} parent=0 // pred_check_branch
    %1329 = sbr.rel (0) target = $region37
  $region36: #{decoder_forward.1} parent=0 // pred_region
    _
  $region37: #{decoder_forward.1} parent=0 // pred_fallthru
    _
  // Predicated region
  $region38: #{decoder_forward.1} parent=0 // pred_check
    _
  $region39: #{decoder_forward.1} parent=0 // pred_check_branch
    %1331 = sbr.rel (0) target = $region41
  $region40: #{decoder_forward.1} parent=0 // pred_region
    _
  $region41: #{decoder_forward.1} parent=0 // pred_fallthru
    _
  // Predicated region
  $region42: #{decoder_forward.1} parent=0 // pred_check
    _
  $region43: #{decoder_forward.1} parent=0 // pred_check_branch
    %1333 = sbr.rel (0) target = $region45
  $region44: #{decoder_forward.1} parent=0 // pred_region
    _
  $region45: #{decoder_forward.1} parent=0 // pred_fallthru
    _
  // Predicated region
  $region46: #{decoder_forward.1} parent=0 // pred_check
    _
  $region47: #{decoder_forward.1} parent=0 // pred_check_branch
    %1335 = sbr.rel (0) target = $region49
  $region48: #{decoder_forward.1} parent=0 // pred_region
    _
  $region49: #{decoder_forward.1} parent=0 // pred_fallthru
    _
  // Predicated region
  $region50: #{decoder_forward.1} parent=0 // pred_check
    _
  $region51: #{decoder_forward.1} parent=0 // pred_check_branch
    %1337 = sbr.rel (0) target = $region53
  $region52: #{decoder_forward.1} parent=0 // pred_region
    _
  $region53: #{decoder_forward.1} parent=0 // pred_fallthru
    _
  // Predicated region
  $region54: #{decoder_forward.1} parent=0 // pred_check
    _
  $region55: #{decoder_forward.1} parent=0 // pred_check_branch
    %1339 = sbr.rel (0) target = $region57
  $region56: #{decoder_forward.1} parent=0 // pred_region
    _
  $region57: #{decoder_forward.1} parent=0 // pred_fallthru
    _

</llo_original>
